<compile_context>
chip_gen: v7x
topology: tpu7x:2x2x1
jax: 0.10.0
libtpu: 0.0.40
codegen_flags: <defaults>
</compile_context>

<pallas_src>
import functools

import jax
import jax.numpy as jnp
from jax.experimental import pallas as pl
from jax.experimental.pallas import tpu as pltpu


# ----------------------------------------------------------------------------
# In-kernel helpers
# ----------------------------------------------------------------------------
def _lstm_gate_update(gates, c, w):
    """PyTorch gate order (i, f, g, o). gates: (B, 4w), c: (B, w)."""
    i_g = jax.nn.sigmoid(gates[:, 0:w])
    f_g = jax.nn.sigmoid(gates[:, w:2 * w])
    g_g = jnp.tanh(gates[:, 2 * w:3 * w])
    o_g = jax.nn.sigmoid(gates[:, 3 * w:4 * w])
    c_new = f_g * c + i_g * g_g
    h_new = o_g * jnp.tanh(c_new)
    return h_new, c_new


def _softmax_store(logits, out_ref):
    m = jnp.max(logits, axis=1, keepdims=True)
    e = jnp.exp(logits - m)
    s = jnp.sum(e, axis=1, keepdims=True)
    out_ref[...] = (e * pl.reciprocal(s, approx=True)).astype(out_ref.dtype)


# ----------------------------------------------------------------------------
# Fused kernel: bidirectional 2-layer LSTM + Linear + softmax
# ----------------------------------------------------------------------------
def _fused_bidir_kernel(x_ref, w1x_ref, w1h_ref, b1_ref,
                        w2bx_ref, w2bh_ref, b2b_ref,
                        w2fx_ref, b2f_ref, wo_ref, bo_ref, out_ref,
                        *, T, B, H):
    f32 = jnp.float32
    bf16 = jnp.bfloat16

    # ---- Layer 1: hoisted input projection (ONE matmul, off the serial path).
    # LHS row block t = [x[t] | x[T-1-t]]  (fwd input | bwd input).
    # Prepared RHS columns are gate-interleaved: [i_f i_b | f_f f_b | g_f g_b | o_f o_b].
    x = x_ref[...]                                                    # (T, B, I) f32
    xp = jnp.concatenate(
        [jnp.concatenate([x[t], x[T - 1 - t]], axis=1) for t in range(T)],
        axis=0).astype(bf16)                                          # (T*B, 2I)
    xg1_flat = (jnp.dot(xp, w1x_ref[...], preferred_element_type=f32)
                + b1_ref[...])                                        # (T*B, 8H)
    xg1 = [xg1_flat[t * B:(t + 1) * B, :] for t in range(T)]          # per-step (B, 8H)

    # ---- Layer 1 recurrence: both directions fused in one (B,2H)@(2H,8H) dot/step.
    # hc = [h_fwd | h_bwd], cc = [c_fwd | c_bwd]; gate math on (B,2H) slabs.
    w1h = w1h_ref[...]
    hc = jnp.zeros((B, 2 * H), f32)
    cc = jnp.zeros((B, 2 * H), f32)
    hc_steps = []
    for s in range(T):                                                # fully unrolled
        gates = xg1[s] + jnp.dot(hc.astype(bf16), w1h, preferred_element_type=f32)
        hc, cc = _lstm_gate_update(gates, cc, 2 * H)
        hc_steps.append(hc)                  # hc_steps[s] = [o1f[s] | o1b[T-1-s]]

    # ---- Layer 2: hoisted input projections (ONE matmul over all time steps).
    # Row block t = [o1f[t], o1b[T-1-t], o1f[T-1-t], o1b[t]]; the layer-2 input at
    # time t lives in columns [0:H] and [3H:4H] (prepared weights zero the rest).
    hp = jnp.concatenate(
        [jnp.concatenate([hc_steps[t], hc_steps[T - 1 - t]], axis=1)
         for t in range(T)], axis=0).astype(bf16)                     # (T*B, 4H)
    xg2_flat = (jnp.dot(hp, w2bx_ref[...], preferred_element_type=f32)
                + b2b_ref[...])                                       # (T*B, 4H)
    xg2b = [xg2_flat[t * B:(t + 1) * B, :] for t in range(T)]         # per-step (B, 4H)

    # Layer-2 forward: only t=0 feeds the head; zero initial state -> W_ih only.
    g2f = (jnp.dot(hp[0:B, :], w2fx_ref[...], preferred_element_type=f32)
           + b2f_ref[...])
    h2f, _ = _lstm_gate_update(g2f, jnp.zeros((B, H), f32), H)

    # ---- Layer 2 backward recurrence: only h @ W_hh (K=H) remains in the loop.
    w2bh = w2bh_ref[...]
    h2b = jnp.zeros((B, H), f32)
    c2b = jnp.zeros((B, H), f32)
    for t in range(T - 1, -1, -1):                                    # fully unrolled
        gates = xg2b[t] + jnp.dot(h2b.astype(bf16), w2bh, preferred_element_type=f32)
        h2b, c2b = _lstm_gate_update(gates, c2b, H)

    # ---- bidirectional sum at t=0, linear head, softmax(dim=1)
    feat = (h2f + h2b).astype(bf16)                                   # (B, H)
    logits = jnp.dot(feat, wo_ref[...], preferred_element_type=f32) + bo_ref[...]
    _softmax_store(logits, out_ref)


# ----------------------------------------------------------------------------
# Fused kernel: unidirectional case.  rnn_output[0] depends only on x[0] (zero
# initial states), so the whole forward collapses to two cell steps + head.
# ----------------------------------------------------------------------------
def _fused_uni_kernel(x0_ref, w1_ref, b1_ref, w2_ref, b2_ref,
                      wo_ref, bo_ref, out_ref, *, B, H):
    f32 = jnp.float32
    bf16 = jnp.bfloat16
    zeros_bh = jnp.zeros((B, H), f32)

    g1 = jnp.dot(x0_ref[...].astype(bf16), w1_ref[...],
                 preferred_element_type=f32) + b1_ref[...]
    h1, _ = _lstm_gate_update(g1, zeros_bh, H)

    g2 = jnp.dot(h1.astype(bf16), w2_ref[...],
                 preferred_element_type=f32) + b2_ref[...]
    h2, _ = _lstm_gate_update(g2, zeros_bh, H)

    logits = jnp.dot(h2.astype(bf16), wo_ref[...],
                     preferred_element_type=f32) + bo_ref[...]
    _softmax_store(logits, out_ref)


# ----------------------------------------------------------------------------
# Parameter init (PyTorch-style) and one-time weight preparation
# ----------------------------------------------------------------------------
def init_params(key, config):
    in_dim = config["input_dim"]
    H = config["hidden_dim"]
    O = config["output_dim"]
    num_dir = 2 if config["bidirectional"] else 1
    k = 1.0 / jnp.sqrt(H)

    params = {"lstm": {}}
    for layer in range(2):                        # module hard-codes num_layers=2
        layer_in = in_dim if layer == 0 else num_dir * H
        for d in range(num_dir):
            key, k1, k2, k3, k4 = jax.random.split(key, 5)
            params["lstm"][(layer, d)] = {
                "w_ih": jax.random.uniform(k1, (4 * H, layer_in), jnp.float32, -k, k),
                "w_hh": jax.random.uniform(k2, (4 * H, H), jnp.float32, -k, k),
                "b_ih": jax.random.uniform(k3, (4 * H,), jnp.float32, -k, k),
                "b_hh": jax.random.uniform(k4, (4 * H,), jnp.float32, -k, k),
            }
    key, k5, k6 = jax.random.split(key, 3)
    ko = 1.0 / jnp.sqrt(H)
    params["out_w"] = jax.random.uniform(k5, (O, H), jnp.float32, -ko, ko)
    params["out_b"] = jax.random.uniform(k6, (O,), jnp.float32, -ko, ko)
    return params


def prepare_params(params, config):
    """Transpose / interleave / embed weights ONCE (not per forward); weights -> bf16."""
    H = config["hidden_dim"]
    I = config["input_dim"]
    bf16 = jnp.bfloat16
    p = {}
    if config["bidirectional"]:
        pf, pb = params["lstm"][(0, 0)], params["lstm"][(0, 1)]
        wfx, wbx = pf["w_ih"].T, pb["w_ih"].T        # (I, 4H), PyTorch col order [i f g o]
        wfh, wbh = pf["w_hh"].T, pb["w_hh"].T        # (H, 4H)
        bf_ = pf["b_ih"] + pf["b_hh"]
        bb_ = pb["b_ih"] + pb["b_hh"]

        # Gate-interleaved layout: columns [i_f i_b | f_f f_b | g_f g_b | o_f o_b].
        w1x = jnp.zeros((2 * I, 8 * H), jnp.float32)   # rows: [x_t | x_{T-1-t}]
        w1h = jnp.zeros((2 * H, 8 * H), jnp.float32)   # rows: [h_fwd | h_bwd]
        b1 = jnp.zeros((8 * H,), jnp.float32)
        for k in range(4):                              # gate k in (i, f, g, o)
            src = slice(k * H, (k + 1) * H)
            dstF = slice(2 * k * H, 2 * k * H + H)
            dstB = slice(2 * k * H + H, 2 * (k + 1) * H)
            w1x = w1x.at[:I, dstF].set(wfx[:, src]).at[I:, dstB].set(wbx[:, src])
            w1h = w1h.at[:H, dstF].set(wfh[:, src]).at[H:, dstB].set(wbh[:, src])
            b1 = b1.at[dstF].set(bf_[src]).at[dstB].set(bb_[src])
        p["w1x"] = w1x.astype(bf16)
        p["w1h"] = w1h.astype(bf16)
        p["b1"] = b1.reshape(1, 8 * H)

        p2f, p2b = params["lstm"][(1, 0)], params["lstm"][(1, 1)]

        def embed_l2_ih(w_ih):
            # Kernel LHS row block t = [o1f[t], o1b[T-1-t], o1f[T-1-t], o1b[t]];
            # the layer-2 input at time t occupies columns [0:H] and [3H:4H].
            wT = w_ih.T                                  # (2H, 4H)
            w = jnp.zeros((4 * H, 4 * H), jnp.float32)
            w = w.at[0:H, :].set(wT[0:H, :])             # multiplies o1f[t]
            w = w.at[3 * H:4 * H, :].set(wT[H:2 * H, :]) # multiplies o1b[t]
            return w.astype(bf16)

        p["w2bx"] = embed_l2_ih(p2b["w_ih"])
        p["w2bh"] = p2b["w_hh"].T.astype(bf16)                          # (H, 4H)
        p["b2b"] = (p2b["b_ih"] + p2b["b_hh"]).reshape(1, 4 * H)
        p["w2fx"] = embed_l2_ih(p2f["w_ih"])
        p["b2f"] = (p2f["b_ih"] + p2f["b_hh"]).reshape(1, 4 * H)
    else:
        p1, p2 = params["lstm"][(0, 0)], params["lstm"][(1, 0)]
        p["w1"] = p1["w_ih"].T.astype(bf16)                             # (I, 4H)
        p["b1"] = (p1["b_ih"] + p1["b_hh"]).reshape(1, 4 * H)
        p["w2"] = p2["w_ih"].T.astype(bf16)                             # (H, 4H)
        p["b2"] = (p2["b_ih"] + p2["b_hh"]).reshape(1, 4 * H)
    p["wo"] = params["out_w"].T.astype(bf16)                            # (H, O)
    p["bo"] = params["out_b"].reshape(1, -1)                            # (1, O)
    return p


# ----------------------------------------------------------------------------
# Forward: one pallas_call for the whole model (no grid; everything in VMEM)
# ----------------------------------------------------------------------------
def lstm_classifier_forward(x, prepared, config):
    """Mirrors LSTMClassifier.forward (eval semantics)."""
    # TODO(synk): inter-layer dropout (PyTorch training mode) omitted — eval semantics.
    T, B, _ = x.shape
    H = config["hidden_dim"]
    O = config["output_dim"]

    if config["bidirectional"]:
        kernel = functools.partial(_fused_bidir_kernel, T=T, B=B, H=H)
        args = (x, prepared["w1x"], prepared["w1h"], prepared["b1"],
                prepared["w2bx"], prepared["w2bh"], prepared["b2b"],
                prepared["w2fx"], prepared["b2f"],
                prepared["wo"], prepared["bo"])
    else:
        kernel = functools.partial(_fused_uni_kernel, B=B, H=H)
        args = (x[0], prepared["w1"], prepared["b1"],
                prepared["w2"], prepared["b2"],
                prepared["wo"], prepared["bo"])

    return pl.pallas_call(
        kernel,
        out_shape=jax.ShapeDtypeStruct((B, O), jnp.float32),
        in_specs=[pl.BlockSpec(memory_space=pltpu.MemorySpace.VMEM) for _ in args],
        out_specs=pl.BlockSpec(memory_space=pltpu.MemorySpace.VMEM),
    )(*args)


# ----------------------------------------------------------------------------
# Pure-JAX f32 reference for verification (full, unskipped computation)
# ----------------------------------------------------------------------------
def _ref_lstm_layer(x, w_ih, w_hh, b_ih, b_hh, reverse):
    T, B, _ = x.shape
    H = w_hh.shape[1]
    b = b_ih + b_hh

    def cell(carry, x_t):
        h, c = carry
        gates = x_t @ w_ih.T + h @ w_hh.T + b
        i, f, g, o = jnp.split(gates, 4, axis=-1)
        i, f, o = jax.nn.sigmoid(i), jax.nn.sigmoid(f), jax.nn.sigmoid(o)
        g = jnp.tanh(g)
        c = f * c + i * g
        h = o * jnp.tanh(c)
        return (h, c), h

    xs = x[::-1] if reverse else x
    carry = (jnp.zeros((B, H), jnp.float32), jnp.zeros((B, H), jnp.float32))
    _, ys = jax.lax.scan(cell, carry, xs)
    return ys[::-1] if reverse else ys


def ref_forward(x, params, config):
    bidirectional = config["bidirectional"]
    num_dir = 2 if bidirectional else 1
    H = config["hidden_dim"]
    layer_in = x
    for layer in range(2):
        outs = [_ref_lstm_layer(layer_in,
                                **{k: v for k, v in params["lstm"][(layer, d)].items()},
                                reverse=(d == 1))
                for d in range(num_dir)]
        layer_in = jnp.concatenate(outs, axis=-1) if num_dir == 2 else outs[0]
    rnn_output = layer_in
    if bidirectional:
        rnn_output = rnn_output[:, :, :H] + rnn_output[:, :, H:]
    logits = rnn_output[0] @ params["out_w"].T + params["out_b"]
    return jax.nn.softmax(logits, axis=1)


if __name__ == "__main__":
    config = {
        "n_layers": 2,
        "input_dim": 16,
        "hidden_dim": 32,
        "output_dim": 8,
        "bidirectional": True,
        "dropout": 0.1,   # inactive in eval semantics
    }
    seq_len, batch = 8, 4

    key = jax.random.PRNGKey(0)
    key, pkey, xkey = jax.random.split(key, 3)
    params = init_params(pkey, config)
    prepared = prepare_params(params, config)
    x = jax.random.normal(xkey, (seq_len, batch, config["input_dim"]), jnp.float32)

    fwd = jax.jit(lambda xx, pp: lstm_classifier_forward(xx, pp, config))
    out = jax.block_until_ready(fwd(x, prepared))
    ref = jax.block_until_ready(ref_forward(x, params, config))
    assert out.shape == (batch, config["output_dim"])
    # bf16 matmuls + approx reciprocal -> loosened tolerance vs f32 reference.
    assert jnp.allclose(out, ref, rtol=5e-2, atol=2e-2), (
        f"bidir max abs err = {jnp.max(jnp.abs(out - ref))}")

    # Also validate the unidirectional code path against the reference.
    config_uni = dict(config, bidirectional=False)
    key, pkey_u = jax.random.split(key)
    params_uni = init_params(pkey_u, config_uni)
    prepared_uni = prepare_params(params_uni, config_uni)
    out_uni = jax.block_until_ready(
        jax.jit(lambda xx, pp: lstm_classifier_forward(xx, pp, config_uni))(
            x, prepared_uni))
    ref_uni = jax.block_until_ready(ref_forward(x, params_uni, config_uni))
    assert jnp.allclose(out_uni, ref_uni, rtol=5e-2, atol=2e-2), (
        f"uni max abs err = {jnp.max(jnp.abs(out_uni - ref_uni))}")

    print("KERNEL_OK")
</pallas_src>

<mosaic_0001>
module attributes {stable_mosaic.version = 11 : i64} {
  func.func @_fused_bidir_kernel(%arg0: memref<8x4x16xf32, #tpu.memory_space<vmem>>, %arg1: memref<32x256xbf16, #tpu.memory_space<vmem>>, %arg2: memref<64x256xbf16, #tpu.memory_space<vmem>>, %arg3: memref<1x256xf32, #tpu.memory_space<vmem>>, %arg4: memref<128x128xbf16, #tpu.memory_space<vmem>>, %arg5: memref<32x128xbf16, #tpu.memory_space<vmem>>, %arg6: memref<1x128xf32, #tpu.memory_space<vmem>>, %arg7: memref<128x128xbf16, #tpu.memory_space<vmem>>, %arg8: memref<1x128xf32, #tpu.memory_space<vmem>>, %arg9: memref<32x8xbf16, #tpu.memory_space<vmem>>, %arg10: memref<1x8xf32, #tpu.memory_space<vmem>>, %arg11: memref<4x8xf32, #tpu.memory_space<vmem>>) attributes {dimension_semantics = [], scalar_prefetch = 0 : i64, scratch_operands = 0 : i64, tpu.core_type = #tpu.core_type<tc>} {
    %c0 = arith.constant 0 : index
    %c0_0 = arith.constant 0 : index
    %c0_1 = arith.constant 0 : index
    %0 = vector.load %arg0[%c0, %c0_0, %c0_1] : memref<8x4x16xf32, #tpu.memory_space<vmem>>, vector<8x4x16xf32>
    %1 = vector.extract_strided_slice %0 {offsets = [0, 0, 0], sizes = [1, 4, 16], strides = [1, 1, 1]} : vector<8x4x16xf32> to vector<1x4x16xf32>
    %2 = vector.shape_cast %1 : vector<1x4x16xf32> to vector<4x16xf32>
    %3 = vector.extract_strided_slice %0 {offsets = [7, 0, 0], sizes = [1, 4, 16], strides = [1, 1, 1]} : vector<8x4x16xf32> to vector<1x4x16xf32>
    %4 = vector.shape_cast %3 : vector<1x4x16xf32> to vector<4x16xf32>
    %5 = tpu.concatenate %2, %4 in 1 : vector<4x16xf32>, vector<4x16xf32> -> vector<4x32xf32>
    %6 = vector.extract_strided_slice %0 {offsets = [1, 0, 0], sizes = [1, 4, 16], strides = [1, 1, 1]} : vector<8x4x16xf32> to vector<1x4x16xf32>
    %7 = vector.shape_cast %6 : vector<1x4x16xf32> to vector<4x16xf32>
    %8 = vector.extract_strided_slice %0 {offsets = [6, 0, 0], sizes = [1, 4, 16], strides = [1, 1, 1]} : vector<8x4x16xf32> to vector<1x4x16xf32>
    %9 = vector.shape_cast %8 : vector<1x4x16xf32> to vector<4x16xf32>
    %10 = tpu.concatenate %7, %9 in 1 : vector<4x16xf32>, vector<4x16xf32> -> vector<4x32xf32>
    %11 = vector.extract_strided_slice %0 {offsets = [2, 0, 0], sizes = [1, 4, 16], strides = [1, 1, 1]} : vector<8x4x16xf32> to vector<1x4x16xf32>
    %12 = vector.shape_cast %11 : vector<1x4x16xf32> to vector<4x16xf32>
    %13 = vector.extract_strided_slice %0 {offsets = [5, 0, 0], sizes = [1, 4, 16], strides = [1, 1, 1]} : vector<8x4x16xf32> to vector<1x4x16xf32>
    %14 = vector.shape_cast %13 : vector<1x4x16xf32> to vector<4x16xf32>
    %15 = tpu.concatenate %12, %14 in 1 : vector<4x16xf32>, vector<4x16xf32> -> vector<4x32xf32>
    %16 = vector.extract_strided_slice %0 {offsets = [3, 0, 0], sizes = [1, 4, 16], strides = [1, 1, 1]} : vector<8x4x16xf32> to vector<1x4x16xf32>
    %17 = vector.shape_cast %16 : vector<1x4x16xf32> to vector<4x16xf32>
    %18 = vector.extract_strided_slice %0 {offsets = [4, 0, 0], sizes = [1, 4, 16], strides = [1, 1, 1]} : vector<8x4x16xf32> to vector<1x4x16xf32>
    %19 = vector.shape_cast %18 : vector<1x4x16xf32> to vector<4x16xf32>
    %20 = tpu.concatenate %17, %19 in 1 : vector<4x16xf32>, vector<4x16xf32> -> vector<4x32xf32>
    %21 = vector.extract_strided_slice %0 {offsets = [4, 0, 0], sizes = [1, 4, 16], strides = [1, 1, 1]} : vector<8x4x16xf32> to vector<1x4x16xf32>
    %22 = vector.shape_cast %21 : vector<1x4x16xf32> to vector<4x16xf32>
    %23 = vector.extract_strided_slice %0 {offsets = [3, 0, 0], sizes = [1, 4, 16], strides = [1, 1, 1]} : vector<8x4x16xf32> to vector<1x4x16xf32>
    %24 = vector.shape_cast %23 : vector<1x4x16xf32> to vector<4x16xf32>
    %25 = tpu.concatenate %22, %24 in 1 : vector<4x16xf32>, vector<4x16xf32> -> vector<4x32xf32>
    %26 = vector.extract_strided_slice %0 {offsets = [5, 0, 0], sizes = [1, 4, 16], strides = [1, 1, 1]} : vector<8x4x16xf32> to vector<1x4x16xf32>
    %27 = vector.shape_cast %26 : vector<1x4x16xf32> to vector<4x16xf32>
    %28 = vector.extract_strided_slice %0 {offsets = [2, 0, 0], sizes = [1, 4, 16], strides = [1, 1, 1]} : vector<8x4x16xf32> to vector<1x4x16xf32>
    %29 = vector.shape_cast %28 : vector<1x4x16xf32> to vector<4x16xf32>
    %30 = tpu.concatenate %27, %29 in 1 : vector<4x16xf32>, vector<4x16xf32> -> vector<4x32xf32>
    %31 = vector.extract_strided_slice %0 {offsets = [6, 0, 0], sizes = [1, 4, 16], strides = [1, 1, 1]} : vector<8x4x16xf32> to vector<1x4x16xf32>
    %32 = vector.shape_cast %31 : vector<1x4x16xf32> to vector<4x16xf32>
    %33 = vector.extract_strided_slice %0 {offsets = [1, 0, 0], sizes = [1, 4, 16], strides = [1, 1, 1]} : vector<8x4x16xf32> to vector<1x4x16xf32>
    %34 = vector.shape_cast %33 : vector<1x4x16xf32> to vector<4x16xf32>
    %35 = tpu.concatenate %32, %34 in 1 : vector<4x16xf32>, vector<4x16xf32> -> vector<4x32xf32>
    %36 = vector.extract_strided_slice %0 {offsets = [7, 0, 0], sizes = [1, 4, 16], strides = [1, 1, 1]} : vector<8x4x16xf32> to vector<1x4x16xf32>
    %37 = vector.shape_cast %36 : vector<1x4x16xf32> to vector<4x16xf32>
    %38 = vector.extract_strided_slice %0 {offsets = [0, 0, 0], sizes = [1, 4, 16], strides = [1, 1, 1]} : vector<8x4x16xf32> to vector<1x4x16xf32>
    %39 = vector.shape_cast %38 : vector<1x4x16xf32> to vector<4x16xf32>
    %40 = tpu.concatenate %37, %39 in 1 : vector<4x16xf32>, vector<4x16xf32> -> vector<4x32xf32>
    %41 = tpu.concatenate %5, %10, %15, %20, %25, %30, %35, %40 in 0 : vector<4x32xf32>, vector<4x32xf32>, vector<4x32xf32>, vector<4x32xf32>, vector<4x32xf32>, vector<4x32xf32>, vector<4x32xf32>, vector<4x32xf32> -> vector<32x32xf32>
    %42 = arith.truncf %41 : vector<32x32xf32> to vector<32x32xbf16>
    %c0_2 = arith.constant 0 : index
    %c0_3 = arith.constant 0 : index
    %43 = vector.load %arg1[%c0_2, %c0_3] : memref<32x256xbf16, #tpu.memory_space<vmem>>, vector<32x256xbf16>
    %cst = arith.constant dense<0.000000e+00> : vector<32x256xf32>
    %44 = tpu.matmul %42, %43, %cst {dimension_numbers = #tpu.dot_dimension_numbers<[1], [0], [0], [1], [0, 0, 1, 1], [], []>} : vector<32x32xbf16>, vector<32x256xbf16>, vector<32x256xf32> -> vector<32x256xf32>
    %c0_4 = arith.constant 0 : index
    %c0_5 = arith.constant 0 : index
    %45 = vector.load %arg3[%c0_4, %c0_5] : memref<1x256xf32, #tpu.memory_space<vmem>>, vector<1x256xf32>
    %46 = vector.broadcast %45 : vector<1x256xf32> to vector<32x256xf32>
    %47 = arith.addf %44, %46 : vector<32x256xf32>
    %48 = vector.extract_strided_slice %47 {offsets = [0, 0], sizes = [4, 256], strides = [1, 1]} : vector<32x256xf32> to vector<4x256xf32>
    %49 = vector.extract_strided_slice %47 {offsets = [4, 0], sizes = [4, 256], strides = [1, 1]} : vector<32x256xf32> to vector<4x256xf32>
    %50 = vector.extract_strided_slice %47 {offsets = [8, 0], sizes = [4, 256], strides = [1, 1]} : vector<32x256xf32> to vector<4x256xf32>
    %51 = vector.extract_strided_slice %47 {offsets = [12, 0], sizes = [4, 256], strides = [1, 1]} : vector<32x256xf32> to vector<4x256xf32>
    %52 = vector.extract_strided_slice %47 {offsets = [16, 0], sizes = [4, 256], strides = [1, 1]} : vector<32x256xf32> to vector<4x256xf32>
    %53 = vector.extract_strided_slice %47 {offsets = [20, 0], sizes = [4, 256], strides = [1, 1]} : vector<32x256xf32> to vector<4x256xf32>
    %54 = vector.extract_strided_slice %47 {offsets = [24, 0], sizes = [4, 256], strides = [1, 1]} : vector<32x256xf32> to vector<4x256xf32>
    %55 = vector.extract_strided_slice %47 {offsets = [28, 0], sizes = [4, 256], strides = [1, 1]} : vector<32x256xf32> to vector<4x256xf32>
    %c0_6 = arith.constant 0 : index
    %c0_7 = arith.constant 0 : index
    %56 = vector.load %arg2[%c0_6, %c0_7] : memref<64x256xbf16, #tpu.memory_space<vmem>>, vector<64x256xbf16>
    %cst_8 = arith.constant 0.000000e+00 : f32
    %57 = vector.broadcast %cst_8 : f32 to vector<4x64xf32>
    %cst_9 = arith.constant 0.000000e+00 : f32
    %58 = vector.broadcast %cst_9 : f32 to vector<4x64xf32>
    %59 = arith.truncf %57 : vector<4x64xf32> to vector<4x64xbf16>
    %cst_10 = arith.constant dense<0.000000e+00> : vector<4x256xf32>
    %60 = tpu.matmul %59, %56, %cst_10 {dimension_numbers = #tpu.dot_dimension_numbers<[1], [0], [0], [1], [0, 0, 1, 1], [], []>} : vector<4x64xbf16>, vector<64x256xbf16>, vector<4x256xf32> -> vector<4x256xf32>
    %61 = arith.addf %48, %60 : vector<4x256xf32>
    %62 = vector.extract_strided_slice %61 {offsets = [0, 0], sizes = [4, 64], strides = [1, 1]} : vector<4x256xf32> to vector<4x64xf32>
    %63 = arith.negf %62 : vector<4x64xf32>
    %64 = math.exp %63 : vector<4x64xf32>
    %cst_11 = arith.constant 1.000000e+00 : f32
    %65 = vector.broadcast %cst_11 : f32 to vector<4x64xf32>
    %66 = arith.addf %65, %64 : vector<4x64xf32>
    %67 = arith.divf %65, %66 : vector<4x64xf32>
    %68 = vector.extract_strided_slice %61 {offsets = [0, 64], sizes = [4, 64], strides = [1, 1]} : vector<4x256xf32> to vector<4x64xf32>
    %69 = arith.negf %68 : vector<4x64xf32>
    %70 = math.exp %69 : vector<4x64xf32>
    %cst_12 = arith.constant 1.000000e+00 : f32
    %71 = vector.broadcast %cst_12 : f32 to vector<4x64xf32>
    %72 = arith.addf %71, %70 : vector<4x64xf32>
    %73 = arith.divf %71, %72 : vector<4x64xf32>
    %74 = vector.extract_strided_slice %61 {offsets = [0, 128], sizes = [4, 64], strides = [1, 1]} : vector<4x256xf32> to vector<4x64xf32>
    %75 = math.tanh %74 : vector<4x64xf32>
    %76 = vector.extract_strided_slice %61 {offsets = [0, 192], sizes = [4, 64], strides = [1, 1]} : vector<4x256xf32> to vector<4x64xf32>
    %77 = arith.negf %76 : vector<4x64xf32>
    %78 = math.exp %77 : vector<4x64xf32>
    %cst_13 = arith.constant 1.000000e+00 : f32
    %79 = vector.broadcast %cst_13 : f32 to vector<4x64xf32>
    %80 = arith.addf %79, %78 : vector<4x64xf32>
    %81 = arith.divf %79, %80 : vector<4x64xf32>
    %82 = arith.mulf %73, %58 : vector<4x64xf32>
    %83 = arith.mulf %67, %75 : vector<4x64xf32>
    %84 = arith.addf %82, %83 : vector<4x64xf32>
    %85 = math.tanh %84 : vector<4x64xf32>
    %86 = arith.mulf %81, %85 : vector<4x64xf32>
    %87 = arith.truncf %86 : vector<4x64xf32> to vector<4x64xbf16>
    %cst_14 = arith.constant dense<0.000000e+00> : vector<4x256xf32>
    %88 = tpu.matmul %87, %56, %cst_14 {dimension_numbers = #tpu.dot_dimension_numbers<[1], [0], [0], [1], [0, 0, 1, 1], [], []>} : vector<4x64xbf16>, vector<64x256xbf16>, vector<4x256xf32> -> vector<4x256xf32>
    %89 = arith.addf %49, %88 : vector<4x256xf32>
    %90 = vector.extract_strided_slice %89 {offsets = [0, 0], sizes = [4, 64], strides = [1, 1]} : vector<4x256xf32> to vector<4x64xf32>
    %91 = arith.negf %90 : vector<4x64xf32>
    %92 = math.exp %91 : vector<4x64xf32>
    %cst_15 = arith.constant 1.000000e+00 : f32
    %93 = vector.broadcast %cst_15 : f32 to vector<4x64xf32>
    %94 = arith.addf %93, %92 : vector<4x64xf32>
    %95 = arith.divf %93, %94 : vector<4x64xf32>
    %96 = vector.extract_strided_slice %89 {offsets = [0, 64], sizes = [4, 64], strides = [1, 1]} : vector<4x256xf32> to vector<4x64xf32>
    %97 = arith.negf %96 : vector<4x64xf32>
    %98 = math.exp %97 : vector<4x64xf32>
    %cst_16 = arith.constant 1.000000e+00 : f32
    %99 = vector.broadcast %cst_16 : f32 to vector<4x64xf32>
    %100 = arith.addf %99, %98 : vector<4x64xf32>
    %101 = arith.divf %99, %100 : vector<4x64xf32>
    %102 = vector.extract_strided_slice %89 {offsets = [0, 128], sizes = [4, 64], strides = [1, 1]} : vector<4x256xf32> to vector<4x64xf32>
    %103 = math.tanh %102 : vector<4x64xf32>
    %104 = vector.extract_strided_slice %89 {offsets = [0, 192], sizes = [4, 64], strides = [1, 1]} : vector<4x256xf32> to vector<4x64xf32>
    %105 = arith.negf %104 : vector<4x64xf32>
    %106 = math.exp %105 : vector<4x64xf32>
    %cst_17 = arith.constant 1.000000e+00 : f32
    %107 = vector.broadcast %cst_17 : f32 to vector<4x64xf32>
    %108 = arith.addf %107, %106 : vector<4x64xf32>
    %109 = arith.divf %107, %108 : vector<4x64xf32>
    %110 = arith.mulf %101, %84 : vector<4x64xf32>
    %111 = arith.mulf %95, %103 : vector<4x64xf32>
    %112 = arith.addf %110, %111 : vector<4x64xf32>
    %113 = math.tanh %112 : vector<4x64xf32>
    %114 = arith.mulf %109, %113 : vector<4x64xf32>
    %115 = arith.truncf %114 : vector<4x64xf32> to vector<4x64xbf16>
    %cst_18 = arith.constant dense<0.000000e+00> : vector<4x256xf32>
    %116 = tpu.matmul %115, %56, %cst_18 {dimension_numbers = #tpu.dot_dimension_numbers<[1], [0], [0], [1], [0, 0, 1, 1], [], []>} : vector<4x64xbf16>, vector<64x256xbf16>, vector<4x256xf32> -> vector<4x256xf32>
    %117 = arith.addf %50, %116 : vector<4x256xf32>
    %118 = vector.extract_strided_slice %117 {offsets = [0, 0], sizes = [4, 64], strides = [1, 1]} : vector<4x256xf32> to vector<4x64xf32>
    %119 = arith.negf %118 : vector<4x64xf32>
    %120 = math.exp %119 : vector<4x64xf32>
    %cst_19 = arith.constant 1.000000e+00 : f32
    %121 = vector.broadcast %cst_19 : f32 to vector<4x64xf32>
    %122 = arith.addf %121, %120 : vector<4x64xf32>
    %123 = arith.divf %121, %122 : vector<4x64xf32>
    %124 = vector.extract_strided_slice %117 {offsets = [0, 64], sizes = [4, 64], strides = [1, 1]} : vector<4x256xf32> to vector<4x64xf32>
    %125 = arith.negf %124 : vector<4x64xf32>
    %126 = math.exp %125 : vector<4x64xf32>
    %cst_20 = arith.constant 1.000000e+00 : f32
    %127 = vector.broadcast %cst_20 : f32 to vector<4x64xf32>
    %128 = arith.addf %127, %126 : vector<4x64xf32>
    %129 = arith.divf %127, %128 : vector<4x64xf32>
    %130 = vector.extract_strided_slice %117 {offsets = [0, 128], sizes = [4, 64], strides = [1, 1]} : vector<4x256xf32> to vector<4x64xf32>
    %131 = math.tanh %130 : vector<4x64xf32>
    %132 = vector.extract_strided_slice %117 {offsets = [0, 192], sizes = [4, 64], strides = [1, 1]} : vector<4x256xf32> to vector<4x64xf32>
    %133 = arith.negf %132 : vector<4x64xf32>
    %134 = math.exp %133 : vector<4x64xf32>
    %cst_21 = arith.constant 1.000000e+00 : f32
    %135 = vector.broadcast %cst_21 : f32 to vector<4x64xf32>
    %136 = arith.addf %135, %134 : vector<4x64xf32>
    %137 = arith.divf %135, %136 : vector<4x64xf32>
    %138 = arith.mulf %129, %112 : vector<4x64xf32>
    %139 = arith.mulf %123, %131 : vector<4x64xf32>
    %140 = arith.addf %138, %139 : vector<4x64xf32>
    %141 = math.tanh %140 : vector<4x64xf32>
    %142 = arith.mulf %137, %141 : vector<4x64xf32>
    %143 = arith.truncf %142 : vector<4x64xf32> to vector<4x64xbf16>
    %cst_22 = arith.constant dense<0.000000e+00> : vector<4x256xf32>
    %144 = tpu.matmul %143, %56, %cst_22 {dimension_numbers = #tpu.dot_dimension_numbers<[1], [0], [0], [1], [0, 0, 1, 1], [], []>} : vector<4x64xbf16>, vector<64x256xbf16>, vector<4x256xf32> -> vector<4x256xf32>
    %145 = arith.addf %51, %144 : vector<4x256xf32>
    %146 = vector.extract_strided_slice %145 {offsets = [0, 0], sizes = [4, 64], strides = [1, 1]} : vector<4x256xf32> to vector<4x64xf32>
    %147 = arith.negf %146 : vector<4x64xf32>
    %148 = math.exp %147 : vector<4x64xf32>
    %cst_23 = arith.constant 1.000000e+00 : f32
    %149 = vector.broadcast %cst_23 : f32 to vector<4x64xf32>
    %150 = arith.addf %149, %148 : vector<4x64xf32>
    %151 = arith.divf %149, %150 : vector<4x64xf32>
    %152 = vector.extract_strided_slice %145 {offsets = [0, 64], sizes = [4, 64], strides = [1, 1]} : vector<4x256xf32> to vector<4x64xf32>
    %153 = arith.negf %152 : vector<4x64xf32>
    %154 = math.exp %153 : vector<4x64xf32>
    %cst_24 = arith.constant 1.000000e+00 : f32
    %155 = vector.broadcast %cst_24 : f32 to vector<4x64xf32>
    %156 = arith.addf %155, %154 : vector<4x64xf32>
    %157 = arith.divf %155, %156 : vector<4x64xf32>
    %158 = vector.extract_strided_slice %145 {offsets = [0, 128], sizes = [4, 64], strides = [1, 1]} : vector<4x256xf32> to vector<4x64xf32>
    %159 = math.tanh %158 : vector<4x64xf32>
    %160 = vector.extract_strided_slice %145 {offsets = [0, 192], sizes = [4, 64], strides = [1, 1]} : vector<4x256xf32> to vector<4x64xf32>
    %161 = arith.negf %160 : vector<4x64xf32>
    %162 = math.exp %161 : vector<4x64xf32>
    %cst_25 = arith.constant 1.000000e+00 : f32
    %163 = vector.broadcast %cst_25 : f32 to vector<4x64xf32>
    %164 = arith.addf %163, %162 : vector<4x64xf32>
    %165 = arith.divf %163, %164 : vector<4x64xf32>
    %166 = arith.mulf %157, %140 : vector<4x64xf32>
    %167 = arith.mulf %151, %159 : vector<4x64xf32>
    %168 = arith.addf %166, %167 : vector<4x64xf32>
    %169 = math.tanh %168 : vector<4x64xf32>
    %170 = arith.mulf %165, %169 : vector<4x64xf32>
    %171 = arith.truncf %170 : vector<4x64xf32> to vector<4x64xbf16>
    %cst_26 = arith.constant dense<0.000000e+00> : vector<4x256xf32>
    %172 = tpu.matmul %171, %56, %cst_26 {dimension_numbers = #tpu.dot_dimension_numbers<[1], [0], [0], [1], [0, 0, 1, 1], [], []>} : vector<4x64xbf16>, vector<64x256xbf16>, vector<4x256xf32> -> vector<4x256xf32>
    %173 = arith.addf %52, %172 : vector<4x256xf32>
    %174 = vector.extract_strided_slice %173 {offsets = [0, 0], sizes = [4, 64], strides = [1, 1]} : vector<4x256xf32> to vector<4x64xf32>
    %175 = arith.negf %174 : vector<4x64xf32>
    %176 = math.exp %175 : vector<4x64xf32>
    %cst_27 = arith.constant 1.000000e+00 : f32
    %177 = vector.broadcast %cst_27 : f32 to vector<4x64xf32>
    %178 = arith.addf %177, %176 : vector<4x64xf32>
    %179 = arith.divf %177, %178 : vector<4x64xf32>
    %180 = vector.extract_strided_slice %173 {offsets = [0, 64], sizes = [4, 64], strides = [1, 1]} : vector<4x256xf32> to vector<4x64xf32>
    %181 = arith.negf %180 : vector<4x64xf32>
    %182 = math.exp %181 : vector<4x64xf32>
    %cst_28 = arith.constant 1.000000e+00 : f32
    %183 = vector.broadcast %cst_28 : f32 to vector<4x64xf32>
    %184 = arith.addf %183, %182 : vector<4x64xf32>
    %185 = arith.divf %183, %184 : vector<4x64xf32>
    %186 = vector.extract_strided_slice %173 {offsets = [0, 128], sizes = [4, 64], strides = [1, 1]} : vector<4x256xf32> to vector<4x64xf32>
    %187 = math.tanh %186 : vector<4x64xf32>
    %188 = vector.extract_strided_slice %173 {offsets = [0, 192], sizes = [4, 64], strides = [1, 1]} : vector<4x256xf32> to vector<4x64xf32>
    %189 = arith.negf %188 : vector<4x64xf32>
    %190 = math.exp %189 : vector<4x64xf32>
    %cst_29 = arith.constant 1.000000e+00 : f32
    %191 = vector.broadcast %cst_29 : f32 to vector<4x64xf32>
    %192 = arith.addf %191, %190 : vector<4x64xf32>
    %193 = arith.divf %191, %192 : vector<4x64xf32>
    %194 = arith.mulf %185, %168 : vector<4x64xf32>
    %195 = arith.mulf %179, %187 : vector<4x64xf32>
    %196 = arith.addf %194, %195 : vector<4x64xf32>
    %197 = math.tanh %196 : vector<4x64xf32>
    %198 = arith.mulf %193, %197 : vector<4x64xf32>
    %199 = arith.truncf %198 : vector<4x64xf32> to vector<4x64xbf16>
    %cst_30 = arith.constant dense<0.000000e+00> : vector<4x256xf32>
    %200 = tpu.matmul %199, %56, %cst_30 {dimension_numbers = #tpu.dot_dimension_numbers<[1], [0], [0], [1], [0, 0, 1, 1], [], []>} : vector<4x64xbf16>, vector<64x256xbf16>, vector<4x256xf32> -> vector<4x256xf32>
    %201 = arith.addf %53, %200 : vector<4x256xf32>
    %202 = vector.extract_strided_slice %201 {offsets = [0, 0], sizes = [4, 64], strides = [1, 1]} : vector<4x256xf32> to vector<4x64xf32>
    %203 = arith.negf %202 : vector<4x64xf32>
    %204 = math.exp %203 : vector<4x64xf32>
    %cst_31 = arith.constant 1.000000e+00 : f32
    %205 = vector.broadcast %cst_31 : f32 to vector<4x64xf32>
    %206 = arith.addf %205, %204 : vector<4x64xf32>
    %207 = arith.divf %205, %206 : vector<4x64xf32>
    %208 = vector.extract_strided_slice %201 {offsets = [0, 64], sizes = [4, 64], strides = [1, 1]} : vector<4x256xf32> to vector<4x64xf32>
    %209 = arith.negf %208 : vector<4x64xf32>
    %210 = math.exp %209 : vector<4x64xf32>
    %cst_32 = arith.constant 1.000000e+00 : f32
    %211 = vector.broadcast %cst_32 : f32 to vector<4x64xf32>
    %212 = arith.addf %211, %210 : vector<4x64xf32>
    %213 = arith.divf %211, %212 : vector<4x64xf32>
    %214 = vector.extract_strided_slice %201 {offsets = [0, 128], sizes = [4, 64], strides = [1, 1]} : vector<4x256xf32> to vector<4x64xf32>
    %215 = math.tanh %214 : vector<4x64xf32>
    %216 = vector.extract_strided_slice %201 {offsets = [0, 192], sizes = [4, 64], strides = [1, 1]} : vector<4x256xf32> to vector<4x64xf32>
    %217 = arith.negf %216 : vector<4x64xf32>
    %218 = math.exp %217 : vector<4x64xf32>
    %cst_33 = arith.constant 1.000000e+00 : f32
    %219 = vector.broadcast %cst_33 : f32 to vector<4x64xf32>
    %220 = arith.addf %219, %218 : vector<4x64xf32>
    %221 = arith.divf %219, %220 : vector<4x64xf32>
    %222 = arith.mulf %213, %196 : vector<4x64xf32>
    %223 = arith.mulf %207, %215 : vector<4x64xf32>
    %224 = arith.addf %222, %223 : vector<4x64xf32>
    %225 = math.tanh %224 : vector<4x64xf32>
    %226 = arith.mulf %221, %225 : vector<4x64xf32>
    %227 = arith.truncf %226 : vector<4x64xf32> to vector<4x64xbf16>
    %cst_34 = arith.constant dense<0.000000e+00> : vector<4x256xf32>
    %228 = tpu.matmul %227, %56, %cst_34 {dimension_numbers = #tpu.dot_dimension_numbers<[1], [0], [0], [1], [0, 0, 1, 1], [], []>} : vector<4x64xbf16>, vector<64x256xbf16>, vector<4x256xf32> -> vector<4x256xf32>
    %229 = arith.addf %54, %228 : vector<4x256xf32>
    %230 = vector.extract_strided_slice %229 {offsets = [0, 0], sizes = [4, 64], strides = [1, 1]} : vector<4x256xf32> to vector<4x64xf32>
    %231 = arith.negf %230 : vector<4x64xf32>
    %232 = math.exp %231 : vector<4x64xf32>
    %cst_35 = arith.constant 1.000000e+00 : f32
    %233 = vector.broadcast %cst_35 : f32 to vector<4x64xf32>
    %234 = arith.addf %233, %232 : vector<4x64xf32>
    %235 = arith.divf %233, %234 : vector<4x64xf32>
    %236 = vector.extract_strided_slice %229 {offsets = [0, 64], sizes = [4, 64], strides = [1, 1]} : vector<4x256xf32> to vector<4x64xf32>
    %237 = arith.negf %236 : vector<4x64xf32>
    %238 = math.exp %237 : vector<4x64xf32>
    %cst_36 = arith.constant 1.000000e+00 : f32
    %239 = vector.broadcast %cst_36 : f32 to vector<4x64xf32>
    %240 = arith.addf %239, %238 : vector<4x64xf32>
    %241 = arith.divf %239, %240 : vector<4x64xf32>
    %242 = vector.extract_strided_slice %229 {offsets = [0, 128], sizes = [4, 64], strides = [1, 1]} : vector<4x256xf32> to vector<4x64xf32>
    %243 = math.tanh %242 : vector<4x64xf32>
    %244 = vector.extract_strided_slice %229 {offsets = [0, 192], sizes = [4, 64], strides = [1, 1]} : vector<4x256xf32> to vector<4x64xf32>
    %245 = arith.negf %244 : vector<4x64xf32>
    %246 = math.exp %245 : vector<4x64xf32>
    %cst_37 = arith.constant 1.000000e+00 : f32
    %247 = vector.broadcast %cst_37 : f32 to vector<4x64xf32>
    %248 = arith.addf %247, %246 : vector<4x64xf32>
    %249 = arith.divf %247, %248 : vector<4x64xf32>
    %250 = arith.mulf %241, %224 : vector<4x64xf32>
    %251 = arith.mulf %235, %243 : vector<4x64xf32>
    %252 = arith.addf %250, %251 : vector<4x64xf32>
    %253 = math.tanh %252 : vector<4x64xf32>
    %254 = arith.mulf %249, %253 : vector<4x64xf32>
    %255 = arith.truncf %254 : vector<4x64xf32> to vector<4x64xbf16>
    %cst_38 = arith.constant dense<0.000000e+00> : vector<4x256xf32>
    %256 = tpu.matmul %255, %56, %cst_38 {dimension_numbers = #tpu.dot_dimension_numbers<[1], [0], [0], [1], [0, 0, 1, 1], [], []>} : vector<4x64xbf16>, vector<64x256xbf16>, vector<4x256xf32> -> vector<4x256xf32>
    %257 = arith.addf %55, %256 : vector<4x256xf32>
    %258 = vector.extract_strided_slice %257 {offsets = [0, 0], sizes = [4, 64], strides = [1, 1]} : vector<4x256xf32> to vector<4x64xf32>
    %259 = arith.negf %258 : vector<4x64xf32>
    %260 = math.exp %259 : vector<4x64xf32>
    %cst_39 = arith.constant 1.000000e+00 : f32
    %261 = vector.broadcast %cst_39 : f32 to vector<4x64xf32>
    %262 = arith.addf %261, %260 : vector<4x64xf32>
    %263 = arith.divf %261, %262 : vector<4x64xf32>
    %264 = vector.extract_strided_slice %257 {offsets = [0, 64], sizes = [4, 64], strides = [1, 1]} : vector<4x256xf32> to vector<4x64xf32>
    %265 = arith.negf %264 : vector<4x64xf32>
    %266 = math.exp %265 : vector<4x64xf32>
    %cst_40 = arith.constant 1.000000e+00 : f32
    %267 = vector.broadcast %cst_40 : f32 to vector<4x64xf32>
    %268 = arith.addf %267, %266 : vector<4x64xf32>
    %269 = arith.divf %267, %268 : vector<4x64xf32>
    %270 = vector.extract_strided_slice %257 {offsets = [0, 128], sizes = [4, 64], strides = [1, 1]} : vector<4x256xf32> to vector<4x64xf32>
    %271 = math.tanh %270 : vector<4x64xf32>
    %272 = vector.extract_strided_slice %257 {offsets = [0, 192], sizes = [4, 64], strides = [1, 1]} : vector<4x256xf32> to vector<4x64xf32>
    %273 = arith.negf %272 : vector<4x64xf32>
    %274 = math.exp %273 : vector<4x64xf32>
    %cst_41 = arith.constant 1.000000e+00 : f32
    %275 = vector.broadcast %cst_41 : f32 to vector<4x64xf32>
    %276 = arith.addf %275, %274 : vector<4x64xf32>
    %277 = arith.divf %275, %276 : vector<4x64xf32>
    %278 = arith.mulf %269, %252 : vector<4x64xf32>
    %279 = arith.mulf %263, %271 : vector<4x64xf32>
    %280 = arith.addf %278, %279 : vector<4x64xf32>
    %281 = math.tanh %280 : vector<4x64xf32>
    %282 = arith.mulf %277, %281 : vector<4x64xf32>
    %283 = tpu.concatenate %86, %282 in 1 : vector<4x64xf32>, vector<4x64xf32> -> vector<4x128xf32>
    %284 = tpu.concatenate %114, %254 in 1 : vector<4x64xf32>, vector<4x64xf32> -> vector<4x128xf32>
    %285 = tpu.concatenate %142, %226 in 1 : vector<4x64xf32>, vector<4x64xf32> -> vector<4x128xf32>
    %286 = tpu.concatenate %170, %198 in 1 : vector<4x64xf32>, vector<4x64xf32> -> vector<4x128xf32>
    %287 = tpu.concatenate %198, %170 in 1 : vector<4x64xf32>, vector<4x64xf32> -> vector<4x128xf32>
    %288 = tpu.concatenate %226, %142 in 1 : vector<4x64xf32>, vector<4x64xf32> -> vector<4x128xf32>
    %289 = tpu.concatenate %254, %114 in 1 : vector<4x64xf32>, vector<4x64xf32> -> vector<4x128xf32>
    %290 = tpu.concatenate %282, %86 in 1 : vector<4x64xf32>, vector<4x64xf32> -> vector<4x128xf32>
    %291 = tpu.concatenate %283, %284, %285, %286, %287, %288, %289, %290 in 0 : vector<4x128xf32>, vector<4x128xf32>, vector<4x128xf32>, vector<4x128xf32>, vector<4x128xf32>, vector<4x128xf32>, vector<4x128xf32>, vector<4x128xf32> -> vector<32x128xf32>
    %292 = arith.truncf %291 : vector<32x128xf32> to vector<32x128xbf16>
    %c0_42 = arith.constant 0 : index
    %c0_43 = arith.constant 0 : index
    %293 = vector.load %arg4[%c0_42, %c0_43] : memref<128x128xbf16, #tpu.memory_space<vmem>>, vector<128x128xbf16>
    %cst_44 = arith.constant dense<0.000000e+00> : vector<32x128xf32>
    %294 = tpu.matmul %292, %293, %cst_44 {dimension_numbers = #tpu.dot_dimension_numbers<[1], [0], [0], [1], [0, 0, 1, 1], [], []>} : vector<32x128xbf16>, vector<128x128xbf16>, vector<32x128xf32> -> vector<32x128xf32>
    %c0_45 = arith.constant 0 : index
    %c0_46 = arith.constant 0 : index
    %295 = vector.load %arg6[%c0_45, %c0_46] : memref<1x128xf32, #tpu.memory_space<vmem>>, vector<1x128xf32>
    %296 = vector.broadcast %295 : vector<1x128xf32> to vector<32x128xf32>
    %297 = arith.addf %294, %296 : vector<32x128xf32>
    %298 = vector.extract_strided_slice %297 {offsets = [0, 0], sizes = [4, 128], strides = [1, 1]} : vector<32x128xf32> to vector<4x128xf32>
    %299 = vector.extract_strided_slice %297 {offsets = [4, 0], sizes = [4, 128], strides = [1, 1]} : vector<32x128xf32> to vector<4x128xf32>
    %300 = vector.extract_strided_slice %297 {offsets = [8, 0], sizes = [4, 128], strides = [1, 1]} : vector<32x128xf32> to vector<4x128xf32>
    %301 = vector.extract_strided_slice %297 {offsets = [12, 0], sizes = [4, 128], strides = [1, 1]} : vector<32x128xf32> to vector<4x128xf32>
    %302 = vector.extract_strided_slice %297 {offsets = [16, 0], sizes = [4, 128], strides = [1, 1]} : vector<32x128xf32> to vector<4x128xf32>
    %303 = vector.extract_strided_slice %297 {offsets = [20, 0], sizes = [4, 128], strides = [1, 1]} : vector<32x128xf32> to vector<4x128xf32>
    %304 = vector.extract_strided_slice %297 {offsets = [24, 0], sizes = [4, 128], strides = [1, 1]} : vector<32x128xf32> to vector<4x128xf32>
    %305 = vector.extract_strided_slice %297 {offsets = [28, 0], sizes = [4, 128], strides = [1, 1]} : vector<32x128xf32> to vector<4x128xf32>
    %306 = vector.extract_strided_slice %292 {offsets = [0, 0], sizes = [4, 128], strides = [1, 1]} : vector<32x128xbf16> to vector<4x128xbf16>
    %c0_47 = arith.constant 0 : index
    %c0_48 = arith.constant 0 : index
    %307 = vector.load %arg7[%c0_47, %c0_48] : memref<128x128xbf16, #tpu.memory_space<vmem>>, vector<128x128xbf16>
    %cst_49 = arith.constant dense<0.000000e+00> : vector<4x128xf32>
    %308 = tpu.matmul %306, %307, %cst_49 {dimension_numbers = #tpu.dot_dimension_numbers<[1], [0], [0], [1], [0, 0, 1, 1], [], []>} : vector<4x128xbf16>, vector<128x128xbf16>, vector<4x128xf32> -> vector<4x128xf32>
    %c0_50 = arith.constant 0 : index
    %c0_51 = arith.constant 0 : index
    %309 = vector.load %arg8[%c0_50, %c0_51] : memref<1x128xf32, #tpu.memory_space<vmem>>, vector<1x128xf32>
    %310 = vector.broadcast %309 : vector<1x128xf32> to vector<4x128xf32>
    %311 = arith.addf %308, %310 : vector<4x128xf32>
    %cst_52 = arith.constant 0.000000e+00 : f32
    %312 = vector.broadcast %cst_52 : f32 to vector<4x32xf32>
    %313 = vector.extract_strided_slice %311 {offsets = [0, 0], sizes = [4, 32], strides = [1, 1]} : vector<4x128xf32> to vector<4x32xf32>
    %314 = arith.negf %313 : vector<4x32xf32>
    %315 = math.exp %314 : vector<4x32xf32>
    %cst_53 = arith.constant 1.000000e+00 : f32
    %316 = vector.broadcast %cst_53 : f32 to vector<4x32xf32>
    %317 = arith.addf %316, %315 : vector<4x32xf32>
    %318 = arith.divf %316, %317 : vector<4x32xf32>
    %319 = vector.extract_strided_slice %311 {offsets = [0, 32], sizes = [4, 32], strides = [1, 1]} : vector<4x128xf32> to vector<4x32xf32>
    %320 = arith.negf %319 : vector<4x32xf32>
    %321 = math.exp %320 : vector<4x32xf32>
    %cst_54 = arith.constant 1.000000e+00 : f32
    %322 = vector.broadcast %cst_54 : f32 to vector<4x32xf32>
    %323 = arith.addf %322, %321 : vector<4x32xf32>
    %324 = arith.divf %322, %323 : vector<4x32xf32>
    %325 = vector.extract_strided_slice %311 {offsets = [0, 64], sizes = [4, 32], strides = [1, 1]} : vector<4x128xf32> to vector<4x32xf32>
    %326 = math.tanh %325 : vector<4x32xf32>
    %327 = vector.extract_strided_slice %311 {offsets = [0, 96], sizes = [4, 32], strides = [1, 1]} : vector<4x128xf32> to vector<4x32xf32>
    %328 = arith.negf %327 : vector<4x32xf32>
    %329 = math.exp %328 : vector<4x32xf32>
    %cst_55 = arith.constant 1.000000e+00 : f32
    %330 = vector.broadcast %cst_55 : f32 to vector<4x32xf32>
    %331 = arith.addf %330, %329 : vector<4x32xf32>
    %332 = arith.divf %330, %331 : vector<4x32xf32>
    %333 = arith.mulf %324, %312 : vector<4x32xf32>
    %334 = arith.mulf %318, %326 : vector<4x32xf32>
    %335 = arith.addf %333, %334 : vector<4x32xf32>
    %336 = math.tanh %335 : vector<4x32xf32>
    %337 = arith.mulf %332, %336 : vector<4x32xf32>
    %c0_56 = arith.constant 0 : index
    %c0_57 = arith.constant 0 : index
    %338 = vector.load %arg5[%c0_56, %c0_57] : memref<32x128xbf16, #tpu.memory_space<vmem>>, vector<32x128xbf16>
    %cst_58 = arith.constant 0.000000e+00 : f32
    %339 = vector.broadcast %cst_58 : f32 to vector<4x32xf32>
    %cst_59 = arith.constant 0.000000e+00 : f32
    %340 = vector.broadcast %cst_59 : f32 to vector<4x32xf32>
    %341 = arith.truncf %339 : vector<4x32xf32> to vector<4x32xbf16>
    %cst_60 = arith.constant dense<0.000000e+00> : vector<4x128xf32>
    %342 = tpu.matmul %341, %338, %cst_60 {dimension_numbers = #tpu.dot_dimension_numbers<[1], [0], [0], [1], [0, 0, 1, 1], [], []>} : vector<4x32xbf16>, vector<32x128xbf16>, vector<4x128xf32> -> vector<4x128xf32>
    %343 = arith.addf %305, %342 : vector<4x128xf32>
    %344 = vector.extract_strided_slice %343 {offsets = [0, 0], sizes = [4, 32], strides = [1, 1]} : vector<4x128xf32> to vector<4x32xf32>
    %345 = arith.negf %344 : vector<4x32xf32>
    %346 = math.exp %345 : vector<4x32xf32>
    %cst_61 = arith.constant 1.000000e+00 : f32
    %347 = vector.broadcast %cst_61 : f32 to vector<4x32xf32>
    %348 = arith.addf %347, %346 : vector<4x32xf32>
    %349 = arith.divf %347, %348 : vector<4x32xf32>
    %350 = vector.extract_strided_slice %343 {offsets = [0, 32], sizes = [4, 32], strides = [1, 1]} : vector<4x128xf32> to vector<4x32xf32>
    %351 = arith.negf %350 : vector<4x32xf32>
    %352 = math.exp %351 : vector<4x32xf32>
    %cst_62 = arith.constant 1.000000e+00 : f32
    %353 = vector.broadcast %cst_62 : f32 to vector<4x32xf32>
    %354 = arith.addf %353, %352 : vector<4x32xf32>
    %355 = arith.divf %353, %354 : vector<4x32xf32>
    %356 = vector.extract_strided_slice %343 {offsets = [0, 64], sizes = [4, 32], strides = [1, 1]} : vector<4x128xf32> to vector<4x32xf32>
    %357 = math.tanh %356 : vector<4x32xf32>
    %358 = vector.extract_strided_slice %343 {offsets = [0, 96], sizes = [4, 32], strides = [1, 1]} : vector<4x128xf32> to vector<4x32xf32>
    %359 = arith.negf %358 : vector<4x32xf32>
    %360 = math.exp %359 : vector<4x32xf32>
    %cst_63 = arith.constant 1.000000e+00 : f32
    %361 = vector.broadcast %cst_63 : f32 to vector<4x32xf32>
    %362 = arith.addf %361, %360 : vector<4x32xf32>
    %363 = arith.divf %361, %362 : vector<4x32xf32>
    %364 = arith.mulf %355, %340 : vector<4x32xf32>
    %365 = arith.mulf %349, %357 : vector<4x32xf32>
    %366 = arith.addf %364, %365 : vector<4x32xf32>
    %367 = math.tanh %366 : vector<4x32xf32>
    %368 = arith.mulf %363, %367 : vector<4x32xf32>
    %369 = arith.truncf %368 : vector<4x32xf32> to vector<4x32xbf16>
    %cst_64 = arith.constant dense<0.000000e+00> : vector<4x128xf32>
    %370 = tpu.matmul %369, %338, %cst_64 {dimension_numbers = #tpu.dot_dimension_numbers<[1], [0], [0], [1], [0, 0, 1, 1], [], []>} : vector<4x32xbf16>, vector<32x128xbf16>, vector<4x128xf32> -> vector<4x128xf32>
    %371 = arith.addf %304, %370 : vector<4x128xf32>
    %372 = vector.extract_strided_slice %371 {offsets = [0, 0], sizes = [4, 32], strides = [1, 1]} : vector<4x128xf32> to vector<4x32xf32>
    %373 = arith.negf %372 : vector<4x32xf32>
    %374 = math.exp %373 : vector<4x32xf32>
    %cst_65 = arith.constant 1.000000e+00 : f32
    %375 = vector.broadcast %cst_65 : f32 to vector<4x32xf32>
    %376 = arith.addf %375, %374 : vector<4x32xf32>
    %377 = arith.divf %375, %376 : vector<4x32xf32>
    %378 = vector.extract_strided_slice %371 {offsets = [0, 32], sizes = [4, 32], strides = [1, 1]} : vector<4x128xf32> to vector<4x32xf32>
    %379 = arith.negf %378 : vector<4x32xf32>
    %380 = math.exp %379 : vector<4x32xf32>
    %cst_66 = arith.constant 1.000000e+00 : f32
    %381 = vector.broadcast %cst_66 : f32 to vector<4x32xf32>
    %382 = arith.addf %381, %380 : vector<4x32xf32>
    %383 = arith.divf %381, %382 : vector<4x32xf32>
    %384 = vector.extract_strided_slice %371 {offsets = [0, 64], sizes = [4, 32], strides = [1, 1]} : vector<4x128xf32> to vector<4x32xf32>
    %385 = math.tanh %384 : vector<4x32xf32>
    %386 = vector.extract_strided_slice %371 {offsets = [0, 96], sizes = [4, 32], strides = [1, 1]} : vector<4x128xf32> to vector<4x32xf32>
    %387 = arith.negf %386 : vector<4x32xf32>
    %388 = math.exp %387 : vector<4x32xf32>
    %cst_67 = arith.constant 1.000000e+00 : f32
    %389 = vector.broadcast %cst_67 : f32 to vector<4x32xf32>
    %390 = arith.addf %389, %388 : vector<4x32xf32>
    %391 = arith.divf %389, %390 : vector<4x32xf32>
    %392 = arith.mulf %383, %366 : vector<4x32xf32>
    %393 = arith.mulf %377, %385 : vector<4x32xf32>
    %394 = arith.addf %392, %393 : vector<4x32xf32>
    %395 = math.tanh %394 : vector<4x32xf32>
    %396 = arith.mulf %391, %395 : vector<4x32xf32>
    %397 = arith.truncf %396 : vector<4x32xf32> to vector<4x32xbf16>
    %cst_68 = arith.constant dense<0.000000e+00> : vector<4x128xf32>
    %398 = tpu.matmul %397, %338, %cst_68 {dimension_numbers = #tpu.dot_dimension_numbers<[1], [0], [0], [1], [0, 0, 1, 1], [], []>} : vector<4x32xbf16>, vector<32x128xbf16>, vector<4x128xf32> -> vector<4x128xf32>
    %399 = arith.addf %303, %398 : vector<4x128xf32>
    %400 = vector.extract_strided_slice %399 {offsets = [0, 0], sizes = [4, 32], strides = [1, 1]} : vector<4x128xf32> to vector<4x32xf32>
    %401 = arith.negf %400 : vector<4x32xf32>
    %402 = math.exp %401 : vector<4x32xf32>
    %cst_69 = arith.constant 1.000000e+00 : f32
    %403 = vector.broadcast %cst_69 : f32 to vector<4x32xf32>
    %404 = arith.addf %403, %402 : vector<4x32xf32>
    %405 = arith.divf %403, %404 : vector<4x32xf32>
    %406 = vector.extract_strided_slice %399 {offsets = [0, 32], sizes = [4, 32], strides = [1, 1]} : vector<4x128xf32> to vector<4x32xf32>
    %407 = arith.negf %406 : vector<4x32xf32>
    %408 = math.exp %407 : vector<4x32xf32>
    %cst_70 = arith.constant 1.000000e+00 : f32
    %409 = vector.broadcast %cst_70 : f32 to vector<4x32xf32>
    %410 = arith.addf %409, %408 : vector<4x32xf32>
    %411 = arith.divf %409, %410 : vector<4x32xf32>
    %412 = vector.extract_strided_slice %399 {offsets = [0, 64], sizes = [4, 32], strides = [1, 1]} : vector<4x128xf32> to vector<4x32xf32>
    %413 = math.tanh %412 : vector<4x32xf32>
    %414 = vector.extract_strided_slice %399 {offsets = [0, 96], sizes = [4, 32], strides = [1, 1]} : vector<4x128xf32> to vector<4x32xf32>
    %415 = arith.negf %414 : vector<4x32xf32>
    %416 = math.exp %415 : vector<4x32xf32>
    %cst_71 = arith.constant 1.000000e+00 : f32
    %417 = vector.broadcast %cst_71 : f32 to vector<4x32xf32>
    %418 = arith.addf %417, %416 : vector<4x32xf32>
    %419 = arith.divf %417, %418 : vector<4x32xf32>
    %420 = arith.mulf %411, %394 : vector<4x32xf32>
    %421 = arith.mulf %405, %413 : vector<4x32xf32>
    %422 = arith.addf %420, %421 : vector<4x32xf32>
    %423 = math.tanh %422 : vector<4x32xf32>
    %424 = arith.mulf %419, %423 : vector<4x32xf32>
    %425 = arith.truncf %424 : vector<4x32xf32> to vector<4x32xbf16>
    %cst_72 = arith.constant dense<0.000000e+00> : vector<4x128xf32>
    %426 = tpu.matmul %425, %338, %cst_72 {dimension_numbers = #tpu.dot_dimension_numbers<[1], [0], [0], [1], [0, 0, 1, 1], [], []>} : vector<4x32xbf16>, vector<32x128xbf16>, vector<4x128xf32> -> vector<4x128xf32>
    %427 = arith.addf %302, %426 : vector<4x128xf32>
    %428 = vector.extract_strided_slice %427 {offsets = [0, 0], sizes = [4, 32], strides = [1, 1]} : vector<4x128xf32> to vector<4x32xf32>
    %429 = arith.negf %428 : vector<4x32xf32>
    %430 = math.exp %429 : vector<4x32xf32>
    %cst_73 = arith.constant 1.000000e+00 : f32
    %431 = vector.broadcast %cst_73 : f32 to vector<4x32xf32>
    %432 = arith.addf %431, %430 : vector<4x32xf32>
    %433 = arith.divf %431, %432 : vector<4x32xf32>
    %434 = vector.extract_strided_slice %427 {offsets = [0, 32], sizes = [4, 32], strides = [1, 1]} : vector<4x128xf32> to vector<4x32xf32>
    %435 = arith.negf %434 : vector<4x32xf32>
    %436 = math.exp %435 : vector<4x32xf32>
    %cst_74 = arith.constant 1.000000e+00 : f32
    %437 = vector.broadcast %cst_74 : f32 to vector<4x32xf32>
    %438 = arith.addf %437, %436 : vector<4x32xf32>
    %439 = arith.divf %437, %438 : vector<4x32xf32>
    %440 = vector.extract_strided_slice %427 {offsets = [0, 64], sizes = [4, 32], strides = [1, 1]} : vector<4x128xf32> to vector<4x32xf32>
    %441 = math.tanh %440 : vector<4x32xf32>
    %442 = vector.extract_strided_slice %427 {offsets = [0, 96], sizes = [4, 32], strides = [1, 1]} : vector<4x128xf32> to vector<4x32xf32>
    %443 = arith.negf %442 : vector<4x32xf32>
    %444 = math.exp %443 : vector<4x32xf32>
    %cst_75 = arith.constant 1.000000e+00 : f32
    %445 = vector.broadcast %cst_75 : f32 to vector<4x32xf32>
    %446 = arith.addf %445, %444 : vector<4x32xf32>
    %447 = arith.divf %445, %446 : vector<4x32xf32>
    %448 = arith.mulf %439, %422 : vector<4x32xf32>
    %449 = arith.mulf %433, %441 : vector<4x32xf32>
    %450 = arith.addf %448, %449 : vector<4x32xf32>
    %451 = math.tanh %450 : vector<4x32xf32>
    %452 = arith.mulf %447, %451 : vector<4x32xf32>
    %453 = arith.truncf %452 : vector<4x32xf32> to vector<4x32xbf16>
    %cst_76 = arith.constant dense<0.000000e+00> : vector<4x128xf32>
    %454 = tpu.matmul %453, %338, %cst_76 {dimension_numbers = #tpu.dot_dimension_numbers<[1], [0], [0], [1], [0, 0, 1, 1], [], []>} : vector<4x32xbf16>, vector<32x128xbf16>, vector<4x128xf32> -> vector<4x128xf32>
    %455 = arith.addf %301, %454 : vector<4x128xf32>
    %456 = vector.extract_strided_slice %455 {offsets = [0, 0], sizes = [4, 32], strides = [1, 1]} : vector<4x128xf32> to vector<4x32xf32>
    %457 = arith.negf %456 : vector<4x32xf32>
    %458 = math.exp %457 : vector<4x32xf32>
    %cst_77 = arith.constant 1.000000e+00 : f32
    %459 = vector.broadcast %cst_77 : f32 to vector<4x32xf32>
    %460 = arith.addf %459, %458 : vector<4x32xf32>
    %461 = arith.divf %459, %460 : vector<4x32xf32>
    %462 = vector.extract_strided_slice %455 {offsets = [0, 32], sizes = [4, 32], strides = [1, 1]} : vector<4x128xf32> to vector<4x32xf32>
    %463 = arith.negf %462 : vector<4x32xf32>
    %464 = math.exp %463 : vector<4x32xf32>
    %cst_78 = arith.constant 1.000000e+00 : f32
    %465 = vector.broadcast %cst_78 : f32 to vector<4x32xf32>
    %466 = arith.addf %465, %464 : vector<4x32xf32>
    %467 = arith.divf %465, %466 : vector<4x32xf32>
    %468 = vector.extract_strided_slice %455 {offsets = [0, 64], sizes = [4, 32], strides = [1, 1]} : vector<4x128xf32> to vector<4x32xf32>
    %469 = math.tanh %468 : vector<4x32xf32>
    %470 = vector.extract_strided_slice %455 {offsets = [0, 96], sizes = [4, 32], strides = [1, 1]} : vector<4x128xf32> to vector<4x32xf32>
    %471 = arith.negf %470 : vector<4x32xf32>
    %472 = math.exp %471 : vector<4x32xf32>
    %cst_79 = arith.constant 1.000000e+00 : f32
    %473 = vector.broadcast %cst_79 : f32 to vector<4x32xf32>
    %474 = arith.addf %473, %472 : vector<4x32xf32>
    %475 = arith.divf %473, %474 : vector<4x32xf32>
    %476 = arith.mulf %467, %450 : vector<4x32xf32>
    %477 = arith.mulf %461, %469 : vector<4x32xf32>
    %478 = arith.addf %476, %477 : vector<4x32xf32>
    %479 = math.tanh %478 : vector<4x32xf32>
    %480 = arith.mulf %475, %479 : vector<4x32xf32>
    %481 = arith.truncf %480 : vector<4x32xf32> to vector<4x32xbf16>
    %cst_80 = arith.constant dense<0.000000e+00> : vector<4x128xf32>
    %482 = tpu.matmul %481, %338, %cst_80 {dimension_numbers = #tpu.dot_dimension_numbers<[1], [0], [0], [1], [0, 0, 1, 1], [], []>} : vector<4x32xbf16>, vector<32x128xbf16>, vector<4x128xf32> -> vector<4x128xf32>
    %483 = arith.addf %300, %482 : vector<4x128xf32>
    %484 = vector.extract_strided_slice %483 {offsets = [0, 0], sizes = [4, 32], strides = [1, 1]} : vector<4x128xf32> to vector<4x32xf32>
    %485 = arith.negf %484 : vector<4x32xf32>
    %486 = math.exp %485 : vector<4x32xf32>
    %cst_81 = arith.constant 1.000000e+00 : f32
    %487 = vector.broadcast %cst_81 : f32 to vector<4x32xf32>
    %488 = arith.addf %487, %486 : vector<4x32xf32>
    %489 = arith.divf %487, %488 : vector<4x32xf32>
    %490 = vector.extract_strided_slice %483 {offsets = [0, 32], sizes = [4, 32], strides = [1, 1]} : vector<4x128xf32> to vector<4x32xf32>
    %491 = arith.negf %490 : vector<4x32xf32>
    %492 = math.exp %491 : vector<4x32xf32>
    %cst_82 = arith.constant 1.000000e+00 : f32
    %493 = vector.broadcast %cst_82 : f32 to vector<4x32xf32>
    %494 = arith.addf %493, %492 : vector<4x32xf32>
    %495 = arith.divf %493, %494 : vector<4x32xf32>
    %496 = vector.extract_strided_slice %483 {offsets = [0, 64], sizes = [4, 32], strides = [1, 1]} : vector<4x128xf32> to vector<4x32xf32>
    %497 = math.tanh %496 : vector<4x32xf32>
    %498 = vector.extract_strided_slice %483 {offsets = [0, 96], sizes = [4, 32], strides = [1, 1]} : vector<4x128xf32> to vector<4x32xf32>
    %499 = arith.negf %498 : vector<4x32xf32>
    %500 = math.exp %499 : vector<4x32xf32>
    %cst_83 = arith.constant 1.000000e+00 : f32
    %501 = vector.broadcast %cst_83 : f32 to vector<4x32xf32>
    %502 = arith.addf %501, %500 : vector<4x32xf32>
    %503 = arith.divf %501, %502 : vector<4x32xf32>
    %504 = arith.mulf %495, %478 : vector<4x32xf32>
    %505 = arith.mulf %489, %497 : vector<4x32xf32>
    %506 = arith.addf %504, %505 : vector<4x32xf32>
    %507 = math.tanh %506 : vector<4x32xf32>
    %508 = arith.mulf %503, %507 : vector<4x32xf32>
    %509 = arith.truncf %508 : vector<4x32xf32> to vector<4x32xbf16>
    %cst_84 = arith.constant dense<0.000000e+00> : vector<4x128xf32>
    %510 = tpu.matmul %509, %338, %cst_84 {dimension_numbers = #tpu.dot_dimension_numbers<[1], [0], [0], [1], [0, 0, 1, 1], [], []>} : vector<4x32xbf16>, vector<32x128xbf16>, vector<4x128xf32> -> vector<4x128xf32>
    %511 = arith.addf %299, %510 : vector<4x128xf32>
    %512 = vector.extract_strided_slice %511 {offsets = [0, 0], sizes = [4, 32], strides = [1, 1]} : vector<4x128xf32> to vector<4x32xf32>
    %513 = arith.negf %512 : vector<4x32xf32>
    %514 = math.exp %513 : vector<4x32xf32>
    %cst_85 = arith.constant 1.000000e+00 : f32
    %515 = vector.broadcast %cst_85 : f32 to vector<4x32xf32>
    %516 = arith.addf %515, %514 : vector<4x32xf32>
    %517 = arith.divf %515, %516 : vector<4x32xf32>
    %518 = vector.extract_strided_slice %511 {offsets = [0, 32], sizes = [4, 32], strides = [1, 1]} : vector<4x128xf32> to vector<4x32xf32>
    %519 = arith.negf %518 : vector<4x32xf32>
    %520 = math.exp %519 : vector<4x32xf32>
    %cst_86 = arith.constant 1.000000e+00 : f32
    %521 = vector.broadcast %cst_86 : f32 to vector<4x32xf32>
    %522 = arith.addf %521, %520 : vector<4x32xf32>
    %523 = arith.divf %521, %522 : vector<4x32xf32>
    %524 = vector.extract_strided_slice %511 {offsets = [0, 64], sizes = [4, 32], strides = [1, 1]} : vector<4x128xf32> to vector<4x32xf32>
    %525 = math.tanh %524 : vector<4x32xf32>
    %526 = vector.extract_strided_slice %511 {offsets = [0, 96], sizes = [4, 32], strides = [1, 1]} : vector<4x128xf32> to vector<4x32xf32>
    %527 = arith.negf %526 : vector<4x32xf32>
    %528 = math.exp %527 : vector<4x32xf32>
    %cst_87 = arith.constant 1.000000e+00 : f32
    %529 = vector.broadcast %cst_87 : f32 to vector<4x32xf32>
    %530 = arith.addf %529, %528 : vector<4x32xf32>
    %531 = arith.divf %529, %530 : vector<4x32xf32>
    %532 = arith.mulf %523, %506 : vector<4x32xf32>
    %533 = arith.mulf %517, %525 : vector<4x32xf32>
    %534 = arith.addf %532, %533 : vector<4x32xf32>
    %535 = math.tanh %534 : vector<4x32xf32>
    %536 = arith.mulf %531, %535 : vector<4x32xf32>
    %537 = arith.truncf %536 : vector<4x32xf32> to vector<4x32xbf16>
    %cst_88 = arith.constant dense<0.000000e+00> : vector<4x128xf32>
    %538 = tpu.matmul %537, %338, %cst_88 {dimension_numbers = #tpu.dot_dimension_numbers<[1], [0], [0], [1], [0, 0, 1, 1], [], []>} : vector<4x32xbf16>, vector<32x128xbf16>, vector<4x128xf32> -> vector<4x128xf32>
    %539 = arith.addf %298, %538 : vector<4x128xf32>
    %540 = vector.extract_strided_slice %539 {offsets = [0, 0], sizes = [4, 32], strides = [1, 1]} : vector<4x128xf32> to vector<4x32xf32>
    %541 = arith.negf %540 : vector<4x32xf32>
    %542 = math.exp %541 : vector<4x32xf32>
    %cst_89 = arith.constant 1.000000e+00 : f32
    %543 = vector.broadcast %cst_89 : f32 to vector<4x32xf32>
    %544 = arith.addf %543, %542 : vector<4x32xf32>
    %545 = arith.divf %543, %544 : vector<4x32xf32>
    %546 = vector.extract_strided_slice %539 {offsets = [0, 32], sizes = [4, 32], strides = [1, 1]} : vector<4x128xf32> to vector<4x32xf32>
    %547 = arith.negf %546 : vector<4x32xf32>
    %548 = math.exp %547 : vector<4x32xf32>
    %cst_90 = arith.constant 1.000000e+00 : f32
    %549 = vector.broadcast %cst_90 : f32 to vector<4x32xf32>
    %550 = arith.addf %549, %548 : vector<4x32xf32>
    %551 = arith.divf %549, %550 : vector<4x32xf32>
    %552 = vector.extract_strided_slice %539 {offsets = [0, 64], sizes = [4, 32], strides = [1, 1]} : vector<4x128xf32> to vector<4x32xf32>
    %553 = math.tanh %552 : vector<4x32xf32>
    %554 = vector.extract_strided_slice %539 {offsets = [0, 96], sizes = [4, 32], strides = [1, 1]} : vector<4x128xf32> to vector<4x32xf32>
    %555 = arith.negf %554 : vector<4x32xf32>
    %556 = math.exp %555 : vector<4x32xf32>
    %cst_91 = arith.constant 1.000000e+00 : f32
    %557 = vector.broadcast %cst_91 : f32 to vector<4x32xf32>
    %558 = arith.addf %557, %556 : vector<4x32xf32>
    %559 = arith.divf %557, %558 : vector<4x32xf32>
    %560 = arith.mulf %551, %534 : vector<4x32xf32>
    %561 = arith.mulf %545, %553 : vector<4x32xf32>
    %562 = arith.addf %560, %561 : vector<4x32xf32>
    %563 = math.tanh %562 : vector<4x32xf32>
    %564 = arith.mulf %559, %563 : vector<4x32xf32>
    %565 = arith.addf %337, %564 : vector<4x32xf32>
    %566 = arith.truncf %565 : vector<4x32xf32> to vector<4x32xbf16>
    %c0_92 = arith.constant 0 : index
    %c0_93 = arith.constant 0 : index
    %567 = vector.load %arg9[%c0_92, %c0_93] : memref<32x8xbf16, #tpu.memory_space<vmem>>, vector<32x8xbf16>
    %cst_94 = arith.constant dense<0.000000e+00> : vector<4x8xf32>
    %568 = tpu.matmul %566, %567, %cst_94 {dimension_numbers = #tpu.dot_dimension_numbers<[1], [0], [0], [1], [0, 0, 1, 1], [], []>} : vector<4x32xbf16>, vector<32x8xbf16>, vector<4x8xf32> -> vector<4x8xf32>
    %c0_95 = arith.constant 0 : index
    %c0_96 = arith.constant 0 : index
    %569 = vector.load %arg10[%c0_95, %c0_96] : memref<1x8xf32, #tpu.memory_space<vmem>>, vector<1x8xf32>
    %570 = vector.broadcast %569 : vector<1x8xf32> to vector<4x8xf32>
    %571 = arith.addf %568, %570 : vector<4x8xf32>
    %cst_97 = arith.constant dense<0xFF800000> : vector<4xf32>
    %572 = vector.multi_reduction <maximumf>, %571, %cst_97 [1] : vector<4x8xf32> to vector<4xf32>
    %573 = vector.shape_cast %572 : vector<4xf32> to vector<4x1xf32>
    %574 = vector.broadcast %573 : vector<4x1xf32> to vector<4x8xf32>
    %575 = arith.subf %571, %574 : vector<4x8xf32>
    %576 = math.exp %575 : vector<4x8xf32>
    %cst_98 = arith.constant dense<0.000000e+00> : vector<4xf32>
    %577 = vector.multi_reduction <add>, %576, %cst_98 [1] : vector<4x8xf32> to vector<4xf32>
    %578 = vector.shape_cast %577 : vector<4xf32> to vector<4x1xf32>
    %579 = tpu.reciprocal %578 {approx = true} : vector<4x1xf32> -> vector<4x1xf32>
    %580 = vector.broadcast %579 : vector<4x1xf32> to vector<4x8xf32>
    %581 = arith.mulf %576, %580 : vector<4x8xf32>
    %c0_99 = arith.constant 0 : index
    %c0_100 = arith.constant 0 : index
    %582 = vector.load %arg11[%c0_99, %c0_100] : memref<4x8xf32, #tpu.memory_space<vmem>>, vector<4x8xf32>
    tpu.vector_store %arg11[%c0_99, %c0_100], %581 {strides = array<i32>} : memref<4x8xf32, #tpu.memory_space<vmem>>, vector<4x8xf32>,
    return
  }
}

</mosaic_0001>

<llo_original>
// kernel: _lambda_.1
$region0: #{_lambda_.1}
  #allocation0 [shape = 'u32[]', space=smem, size = 0x4, offset = 0x4, fixed_abs, tag = 'smem constant byte address 0x4 - core index']
  #allocation1 [shape = 'u32[144,128]{1,0:T(1,128)}', space=vmem, size = 0x12000, scoped, tag = 'internal scratch']
  %s0 = inlined_call_operand.hbm [shape: f32[8,4,16], index: 0, kind: input, shape index: {}]
  %s1 = inlined_call_operand.vmem [shape: bf16[32,256], index: 1, kind: input, shape index: {}]
  %s2 = inlined_call_operand.hbm [shape: bf16[64,256], index: 2, kind: input, shape index: {}]
  %s3 = inlined_call_operand.vmem [shape: f32[1,256], index: 3, kind: input, shape index: {}]
  %s4 = inlined_call_operand.hbm [shape: bf16[128,128], index: 4, kind: input, shape index: {}]
  %s5 = inlined_call_operand.hbm [shape: bf16[32,128], index: 5, kind: input, shape index: {}]
  %s6 = inlined_call_operand.vmem [shape: f32[1,128], index: 6, kind: input, shape index: {}]
  %s7 = inlined_call_operand.hbm [shape: bf16[128,128], index: 7, kind: input, shape index: {}]
  %s8 = inlined_call_operand.vmem [shape: f32[1,128], index: 8, kind: input, shape index: {}]
  %s9 = inlined_call_operand.vmem [shape: bf16[32,8], index: 9, kind: input, shape index: {}]
  %s10 = inlined_call_operand.vmem [shape: f32[1,8], index: 10, kind: input, shape index: {}]
  %s11 = inlined_call_operand.hbm [shape: f32[4,8], index: 11, kind: output, shape index: {}]
  %s12 = sld [smem:[#allocation0]]
  $region74: #{_lambda_.1} parent=0
    _
  %s14 = ssub.s32 1, %s12
  %s15 = scalar_select 0, %s14, %s12
  $region1: #{_lambda_.1} parent=0
    #allocation2 [shape = 'u8[16384]{0}', space=vmem, size = 0x4000, scoped, tag = 'input window, operand 0, single buffered']
    #allocation3 [shape = 's32[1]{0}', space=sflag, size = 0x4, scoped, tag = 'scoped memory for _lambda_.1']
    #allocation4 [shape = 's32[1]{0}', space=sflag, size = 0x4, scoped, tag = 'scoped memory for _lambda_.1']
    #allocation5 [shape = 'u8[32768]{0}', space=vmem, size = 0x8000, scoped, tag = 'input window, operand 2, single buffered']
    #allocation6 [shape = 's32[1]{0}', space=sflag, size = 0x4, scoped, tag = 'scoped memory for _lambda_.1']
    #allocation7 [shape = 'u8[32768]{0}', space=vmem, size = 0x8000, scoped, tag = 'input window, operand 4, single buffered']
    #allocation8 [shape = 'u8[8192]{0}', space=vmem, size = 0x2000, scoped, tag = 'input window, operand 5, single buffered']
    #allocation9 [shape = 's32[1]{0}', space=sflag, size = 0x4, scoped, tag = 'scoped memory for _lambda_.1']
    #allocation10 [shape = 'u8[32768]{0}', space=vmem, size = 0x8000, scoped, tag = 'input window, operand 7, single buffered']
    #allocation11 [shape = 'u8[2048]{0}', space=vmem, size = 0x800, scoped, tag = 'output window, operand 0, single buffered']
    %16 = vsyncpa [#allocation3], 0
    %17 = vsyncpa [#allocation6], 0
    %18 = vsyncpa [#allocation9], 0
    %19 = vsyncpa [#allocation4], 0
    // Predicated region
    $region2: #{_lambda_.1} parent=1 // pred_check
      _
    $region3: #{_lambda_.1} parent=1 // pred_check_branch
      %21 = sbr.rel (0) target = $region5
    $region4: #{_lambda_.1} parent=1 // pred_region
      %s23 = ssub.s32 512, 512
      %24 = vsyncadd [#allocation3], %s23
      %s25 = sshll.u32 [#allocation2], 4
      %s26 = int_to_ptr.vmem [resolvable:$true] %s25
      %31 = dma.hbm_to_vmem [thread:$0]  %s0, 512, %s26, [#allocation3], 64, 64, 4
    $region5: #{_lambda_.1} parent=1 // pred_fallthru
      _
    // Predicated region
    $region6: #{_lambda_.1} parent=1 // pred_check
      _
    $region7: #{_lambda_.1} parent=1 // pred_check_branch
      %33 = sbr.rel (0) target = $region9
    $region8: #{_lambda_.1} parent=1 // pred_region
      _
    $region9: #{_lambda_.1} parent=1 // pred_fallthru
      _
    // Predicated region
    $region10: #{_lambda_.1} parent=1 // pred_check
      _
    $region11: #{_lambda_.1} parent=1 // pred_check_branch
      %35 = sbr.rel (0) target = $region13
    $region12: #{_lambda_.1} parent=1 // pred_region
      %s37 = ssub.s32 1024, 1024
      %38 = vsyncadd [#allocation6], %s37
      %s39 = sshll.u32 [#allocation5], 4
      %s40 = int_to_ptr.vmem [resolvable:$true] %s39
      %45 = dma.hbm_to_vmem [thread:$0]  %s2, 1024, %s40, [#allocation6], 128, 128, 8
    $region13: #{_lambda_.1} parent=1 // pred_fallthru
      _
    // Predicated region
    $region14: #{_lambda_.1} parent=1 // pred_check
      _
    $region15: #{_lambda_.1} parent=1 // pred_check_branch
      %47 = sbr.rel (0) target = $region17
    $region16: #{_lambda_.1} parent=1 // pred_region
      _
    $region17: #{_lambda_.1} parent=1 // pred_fallthru
      _
    // Predicated region
    $region18: #{_lambda_.1} parent=1 // pred_check
      _
    $region19: #{_lambda_.1} parent=1 // pred_check_branch
      %49 = sbr.rel (0) target = $region21
    $region20: #{_lambda_.1} parent=1 // pred_region
      %s51 = ssub.s32 1024, 1024
      %52 = vsyncadd [#allocation6], %s51
      %s53 = sshll.u32 [#allocation7], 4
      %s54 = int_to_ptr.vmem [resolvable:$true] %s53
      %59 = dma.hbm_to_vmem [thread:$0]  %s4, 1024, %s54, [#allocation6], 64, 64, 4
    $region21: #{_lambda_.1} parent=1 // pred_fallthru
      _
    // Predicated region
    $region22: #{_lambda_.1} parent=1 // pred_check
      _
    $region23: #{_lambda_.1} parent=1 // pred_check_branch
      %61 = sbr.rel (0) target = $region25
    $region24: #{_lambda_.1} parent=1 // pred_region
      %s63 = ssub.s32 256, 256
      %64 = vsyncadd [#allocation9], %s63
      %s65 = sshll.u32 [#allocation8], 4
      %s66 = int_to_ptr.vmem [resolvable:$true] %s65
      %71 = dma.hbm_to_vmem [thread:$0]  %s5, 256, %s66, [#allocation9], 64, 64, 4
    $region25: #{_lambda_.1} parent=1 // pred_fallthru
      _
    // Predicated region
    $region26: #{_lambda_.1} parent=1 // pred_check
      _
    $region27: #{_lambda_.1} parent=1 // pred_check_branch
      %73 = sbr.rel (0) target = $region29
    $region28: #{_lambda_.1} parent=1 // pred_region
      _
    $region29: #{_lambda_.1} parent=1 // pred_fallthru
      _
    // Predicated region
    $region30: #{_lambda_.1} parent=1 // pred_check
      _
    $region31: #{_lambda_.1} parent=1 // pred_check_branch
      %75 = sbr.rel (0) target = $region33
    $region32: #{_lambda_.1} parent=1 // pred_region
      %s77 = ssub.s32 1024, 1024
      %78 = vsyncadd [#allocation9], %s77
      %s79 = sshll.u32 [#allocation10], 4
      %s80 = int_to_ptr.vmem [resolvable:$true] %s79
      %85 = dma.hbm_to_vmem [thread:$0]  %s7, 1024, %s80, [#allocation9], 64, 64, 4
    $region33: #{_lambda_.1} parent=1 // pred_fallthru
      _
    // Predicated region
    $region34: #{_lambda_.1} parent=1 // pred_check
      _
    $region35: #{_lambda_.1} parent=1 // pred_check_branch
      %87 = sbr.rel (0) target = $region37
    $region36: #{_lambda_.1} parent=1 // pred_region
      _
    $region37: #{_lambda_.1} parent=1 // pred_fallthru
      _
    // Predicated region
    $region38: #{_lambda_.1} parent=1 // pred_check
      _
    $region39: #{_lambda_.1} parent=1 // pred_check_branch
      %89 = sbr.rel (0) target = $region41
    $region40: #{_lambda_.1} parent=1 // pred_region
      _
    $region41: #{_lambda_.1} parent=1 // pred_fallthru
      _
    // Predicated region
    $region42: #{_lambda_.1} parent=1 // pred_check
      _
    $region43: #{_lambda_.1} parent=1 // pred_check_branch
      %91 = sbr.rel (0) target = $region45
    $region44: #{_lambda_.1} parent=1 // pred_region
      _
    $region45: #{_lambda_.1} parent=1 // pred_fallthru
      _
    // Predicated region
    $region46: #{_lambda_.1} parent=1 // pred_check
      _
    $region47: #{_lambda_.1} parent=1 // pred_check_branch
      %93 = sbr.rel (0) target = $region49
    $region48: #{_lambda_.1} parent=1 // pred_region
      %94 = dma.done [#allocation3], 512
    $region49: #{_lambda_.1} parent=1 // pred_fallthru
      _
    // Predicated region
    $region50: #{_lambda_.1} parent=1 // pred_check
      _
    $region51: #{_lambda_.1} parent=1 // pred_check_branch
      %96 = sbr.rel (0) target = $region53
    $region52: #{_lambda_.1} parent=1 // pred_region
      %97 = dma.done [#allocation6], 1024
    $region53: #{_lambda_.1} parent=1 // pred_fallthru
      _
    // Predicated region
    $region54: #{_lambda_.1} parent=1 // pred_check
      _
    $region55: #{_lambda_.1} parent=1 // pred_check_branch
      %99 = sbr.rel (0) target = $region57
    $region56: #{_lambda_.1} parent=1 // pred_region
      %100 = dma.done [#allocation6], 1024
    $region57: #{_lambda_.1} parent=1 // pred_fallthru
      _
    // Predicated region
    $region58: #{_lambda_.1} parent=1 // pred_check
      _
    $region59: #{_lambda_.1} parent=1 // pred_check_branch
      %102 = sbr.rel (0) target = $region61
    $region60: #{_lambda_.1} parent=1 // pred_region
      %103 = dma.done [#allocation9], 256
    $region61: #{_lambda_.1} parent=1 // pred_fallthru
      _
    // Predicated region
    $region62: #{_lambda_.1} parent=1 // pred_check
      _
    $region63: #{_lambda_.1} parent=1 // pred_check_branch
      %105 = sbr.rel (0) target = $region65
    $region64: #{_lambda_.1} parent=1 // pred_region
      %106 = dma.done [#allocation9], 1024
    $region65: #{_lambda_.1} parent=1 // pred_fallthru
      _
    %v108 = vld [vmem:[#allocation2] sm:$0xf]
    %v109 = vld [vmem:[#allocation2 + $0x4] sm:$0xf]
    %v110 = vld [vmem:[#allocation2 + $0x8] sm:$0xf]
    %v111 = vld [vmem:[#allocation2 + $0xc] sm:$0xf]
    %v112 = vld [vmem:[#allocation2 + $0x10] sm:$0xf]
    %v113 = vld [vmem:[#allocation2 + $0x14] sm:$0xf]
    %v114 = vld [vmem:[#allocation2 + $0x18] sm:$0xf]
    %v115 = vld [vmem:[#allocation2 + $0x1c] sm:$0xf]
    %117 = vrot.lane.b32.xlu0 %v115, 16
    %v118 = vpop.permute.xlu0 %117
    %vm120 = vcmask 130048
    %v121 = vsel %vm120, %v108, %v118
    %123 = vrot.lane.b32.xlu0 %v114, 16
    %v124 = vpop.permute.xlu0 %123
    %v126 = vsel %vm120, %v109, %v124
    %128 = vrot.lane.b32.xlu0 %v113, 16
    %v129 = vpop.permute.xlu0 %128
    %v131 = vsel %vm120, %v110, %v129
    %133 = vrot.lane.b32.xlu0 %v112, 16
    %v134 = vpop.permute.xlu0 %133
    %v136 = vsel %vm120, %v111, %v134
    %138 = vrot.lane.b32.xlu0 %v111, 16
    %v139 = vpop.permute.xlu0 %138
    %v141 = vsel %vm120, %v112, %v139
    %143 = vrot.lane.b32.xlu0 %v110, 16
    %v144 = vpop.permute.xlu0 %143
    %v146 = vsel %vm120, %v113, %v144
    %148 = vrot.lane.b32.xlu0 %v109, 16
    %v149 = vpop.permute.xlu0 %148
    %v151 = vsel %vm120, %v114, %v149
    %153 = vrot.lane.b32.xlu0 %v108, 16
    %v154 = vpop.permute.xlu0 %153
    %v156 = vsel %vm120, %v115, %v154
    %v158 = vrot.slane %v126, 4
    %v161 = vrot.slane %v136, 4
    %v164 = vrot.slane %v146, 4
    %v167 = vrot.slane %v156, 4
    %vm169 = vcmask 1043456
    %v170 = vsel %vm169, %v121, %v158
    %v171 = vsel %vm169, %v131, %v161
    %v172 = vsel %vm169, %v141, %v164
    %v173 = vsel %vm169, %v151, %v167
    %v174 = vpack.c.bf16 %v171, %v170
    %v175 = vpack.c.bf16 %v173, %v172
    %v176 = vld [vmem:[%s1] sm:$0xff]
    %v177 = vld [vmem:[%s1 + $0x8] sm:$0xff]
    %v178 = vld [vmem:[%s1 + $0x10] sm:$0xff]
    %v179 = vld [vmem:[%s1 + $0x18] sm:$0xff]
    %v180 = vld [vmem:[%s3] sm:$0x3]
    %v182 = vlaneseq
    %v183 = vshrl.u32 %v182, 7
    %v184 = vsub.s32 0, %v183
    %v185 = vrot.slane %v180, %v184
    %v186 = vlaneseq
    %v187 = vshrl.u32 %v186, 7
    %v188 = vsub.s32 1, %v187
    %v189 = vrot.slane %v180, %v188
    %v196 = vunpack.c.l.b16 %v176
    %v197 = vunpack.c.h.b16 %v176
    %v198 = vunpack.c.l.b16 %v177
    %v199 = vunpack.c.h.b16 %v177
    %v200 = vunpack.c.l.b16 %v178
    %v201 = vunpack.c.h.b16 %v178
    %v202 = vunpack.c.l.b16 %v179
    %v203 = vunpack.c.h.b16 %v179
    %v204 = vpack.c.b16 %v198, %v196
    %v205 = vpack.c.b16 %v199, %v197
    %v206 = vpack.c.b16 %v202, %v200
    %v207 = vpack.c.b16 %v203, %v201
    %vm212 = vcmask 261120
    %v214 = vsel %vm212, %v174, 0
    %v217 = vsel %vm212, %v175, 0
    %219 = vmatprep.subr.bf16.mxu0 %v205
    %220 = vmatpush1.bf16.msra.mxu0 %v204
    %221 = vmatprep.subr.bf16.mxu0 %v207
    %222 = vmatpush1.bf16.msra.mxu0 %v206
    %223 = vmatprep.subr.bf16.mxu0 0
    %224 = vmatpush1.bf16.msra.mxu0 0
    %225 = vmatprep.subr.bf16.mxu0 0
    %226 = vmatpush1.bf16.msra.mxu0 0
    %227 = vmatprep.subr.bf16.mxu0 0
    %228 = vmatpush1.bf16.msra.mxu0 0
    %229 = vmatprep.subr.bf16.mxu0 0
    %230 = vmatpush1.bf16.msra.mxu0 0
    %231 = vmatprep.subr.bf16.mxu0 0
    %232 = vmatpush1.bf16.msra.mxu0 0
    %233 = vmatprep.subr.bf16.mxu0 0
    %234 = vmatpush1.bf16.msra.mxu0 0
    %235 = vmatprep.subr.bf16.mxu0 0
    %236 = vmatpush1.bf16.msra.mxu0 0
    %237 = vmatprep.subr.bf16.mxu0 0
    %238 = vmatpush1.bf16.msra.mxu0 0
    %239 = vmatprep.subr.bf16.mxu0 0
    %240 = vmatpush1.bf16.msra.mxu0 0
    %241 = vmatprep.subr.bf16.mxu0 0
    %242 = vmatpush1.bf16.msra.mxu0 0
    %243 = vmatprep.subr.bf16.mxu0 0
    %244 = vmatpush1.bf16.msra.mxu0 0
    %245 = vmatprep.subr.bf16.mxu0 0
    %246 = vmatpush1.bf16.msra.mxu0 0
    %247 = vmatprep.subr.bf16.mxu0 0
    %248 = vmatpush1.bf16.msra.mxu0 0
    %249 = vmatprep.subr.bf16.mxu0 0
    %250 = vmatpush1.bf16.msra.mxu0 0
    %251 = vmatprep.mubr.bf16.mxu0 0
    %252 = vmatmul.mubr.bf16.gmra.mrb[0].mxu0 %v214
    %v253 = vpop.f32.mrb[0].mxu0
    %v254 = vadd.f32 %v185, %v253
    %v255 = vpop.f32.mrb[0].mxu0
    %v256 = vadd.f32 %v189, %v255
    %v257 = vpop.f32.mrb[0].mxu0
    %v258 = vadd.f32 %v185, %v257
    %v259 = vpop.f32.mrb[0].mxu0
    %v260 = vadd.f32 %v189, %v259
    %261 = vmatprep.mubr.bf16.mxu0 0
    %262 = vmatmul.mubr.bf16.gmra.mrb[0].mxu0 %v217
    %v263 = vpop.f32.mrb[0].mxu0
    %v264 = vadd.f32 %v185, %v263
    %v265 = vpop.f32.mrb[0].mxu0
    %v266 = vadd.f32 %v189, %v265
    %v267 = vpop.f32.mrb[0].mxu0
    %v268 = vadd.f32 %v185, %v267
    %v269 = vpop.f32.mrb[0].mxu0
    %v270 = vadd.f32 %v189, %v269
    %271 = vdwg.mxu0
    %v272 = vld [vmem:[#allocation5] sm:$0xff]
    %v273 = vld [vmem:[#allocation5 + $0x8] sm:$0xff]
    %v274 = vld [vmem:[#allocation5 + $0x10] sm:$0xff]
    %v275 = vld [vmem:[#allocation5 + $0x18] sm:$0xff]
    %v276 = vld [vmem:[#allocation5 + $0x20] sm:$0xff]
    %v277 = vld [vmem:[#allocation5 + $0x28] sm:$0xff]
    %v278 = vld [vmem:[#allocation5 + $0x30] sm:$0xff]
    %v279 = vld [vmem:[#allocation5 + $0x38] sm:$0xff]
    %v288 = vunpack.c.l.b16 %v272
    %v289 = vunpack.c.h.b16 %v272
    %v290 = vunpack.c.l.b16 %v273
    %v291 = vunpack.c.h.b16 %v273
    %v292 = vunpack.c.l.b16 %v274
    %v293 = vunpack.c.h.b16 %v274
    %v294 = vunpack.c.l.b16 %v275
    %v295 = vunpack.c.h.b16 %v275
    %v296 = vunpack.c.l.b16 %v276
    %v297 = vunpack.c.h.b16 %v276
    %v298 = vunpack.c.l.b16 %v277
    %v299 = vunpack.c.h.b16 %v277
    %v300 = vunpack.c.l.b16 %v278
    %v301 = vunpack.c.h.b16 %v278
    %v302 = vunpack.c.l.b16 %v279
    %v303 = vunpack.c.h.b16 %v279
    %v304 = vpack.c.b16 %v290, %v288
    %v305 = vpack.c.b16 %v291, %v289
    %v306 = vpack.c.b16 %v294, %v292
    %v307 = vpack.c.b16 %v295, %v293
    %v308 = vpack.c.b16 %v298, %v296
    %v309 = vpack.c.b16 %v299, %v297
    %v310 = vpack.c.b16 %v302, %v300
    %v311 = vpack.c.b16 %v303, %v301
    %vm320 = vcmask 523264
    %v322 = vsel %vm320, 0, 0
    %324 = vmatprep.subr.bf16.mxu0 %v305
    %325 = vmatpush1.bf16.msra.mxu0 %v304
    %326 = vmatprep.subr.bf16.mxu0 %v307
    %327 = vmatpush1.bf16.msra.mxu0 %v306
    %328 = vmatprep.subr.bf16.mxu0 %v309
    %329 = vmatpush1.bf16.msra.mxu0 %v308
    %330 = vmatprep.subr.bf16.mxu0 %v311
    %331 = vmatpush1.bf16.msra.mxu0 %v310
    %332 = vmatprep.subr.bf16.mxu0 0
    %333 = vmatpush1.bf16.msra.mxu0 0
    %334 = vmatprep.subr.bf16.mxu0 0
    %335 = vmatpush1.bf16.msra.mxu0 0
    %336 = vmatprep.subr.bf16.mxu0 0
    %337 = vmatpush1.bf16.msra.mxu0 0
    %338 = vmatprep.subr.bf16.mxu0 0
    %339 = vmatpush1.bf16.msra.mxu0 0
    %340 = vmatprep.subr.bf16.mxu0 0
    %341 = vmatpush1.bf16.msra.mxu0 0
    %342 = vmatprep.subr.bf16.mxu0 0
    %343 = vmatpush1.bf16.msra.mxu0 0
    %344 = vmatprep.subr.bf16.mxu0 0
    %345 = vmatpush1.bf16.msra.mxu0 0
    %346 = vmatprep.subr.bf16.mxu0 0
    %347 = vmatpush1.bf16.msra.mxu0 0
    %348 = vmatprep.subr.bf16.mxu0 0
    %349 = vmatpush1.bf16.msra.mxu0 0
    %350 = vmatprep.subr.bf16.mxu0 0
    %351 = vmatpush1.bf16.msra.mxu0 0
    %352 = vmatprep.subr.bf16.mxu0 0
    %353 = vmatpush1.bf16.msra.mxu0 0
    %354 = vmatprep.subr.bf16.mxu0 0
    %355 = vmatpush1.bf16.msra.mxu0 0
    %356 = vmatprep.mubr.bf16.mxu0 0
    %357 = vmatmul.mubr.bf16.gmra.mrb[0].mxu0 %v322
    %v358 = vpop.f32.mrb[0].mxu0
    %v359 = vadd.f32 0.0, %v358
    %v360 = vpop.f32.mrb[0].mxu0
    %v361 = vadd.f32 0.0, %v360
    %v362 = vpop.f32.mrb[0].mxu0
    %v363 = vpop.f32.mrb[0].mxu0
    %364 = vdwg.mxu0
    %v365 = vadd.f32 %v254, %v359
    %v366 = vadd.f32 %v256, %v361
    %v367 = vxor.u32 %v365, 2147483648
    %v368 = vmul.f32 %v367, 1.442695
    %v369 = vpow.pop %v368
    %v370 = vadd.f32 %v369, 1.0
    %v371 = vrcp.pop %v370
    %v372 = vmul.f32 1.0, %v371
    %v373 = vtanh.pop %v366
    %v374 = vxor.u32 %v366, 2147483648
    %v375 = vmul.f32 %v374, 1.442695
    %v376 = vpow.pop %v375
    %v377 = vadd.f32 %v376, 1.0
    %v378 = vrcp.pop %v377
    %v379 = vmul.f32 1.0, %v378
    %v380 = vmul.f32 %v372, 0.0
    %v381 = vmul.f32 %v372, %v373
    %383 = vrot.lane.b32.xlu0 %v381, 64
    %v384 = vpop.permute.xlu0 %383
    %v386 = vadd.f32 %v380, %v384
    %v387 = vtanh.pop %v386
    %v388 = vmul.f32 %v379, %v387
    %v389 = vpack.c.bf16 %v388, %v388
    %391 = vrot.lane.b32.xlu0 %v389, 64
    %v392 = vpop.permute.xlu0 %391
    %v394 = vsel %vm320, %v392, 0
    %396 = vmatprep.subr.bf16.mxu0 %v305
    %397 = vmatpush1.bf16.msra.mxu0 %v304
    %398 = vmatprep.subr.bf16.mxu0 %v307
    %399 = vmatpush1.bf16.msra.mxu0 %v306
    %400 = vmatprep.subr.bf16.mxu0 %v309
    %401 = vmatpush1.bf16.msra.mxu0 %v308
    %402 = vmatprep.subr.bf16.mxu0 %v311
    %403 = vmatpush1.bf16.msra.mxu0 %v310
    %404 = vmatprep.subr.bf16.mxu0 0
    %405 = vmatpush1.bf16.msra.mxu0 0
    %406 = vmatprep.subr.bf16.mxu0 0
    %407 = vmatpush1.bf16.msra.mxu0 0
    %408 = vmatprep.subr.bf16.mxu0 0
    %409 = vmatpush1.bf16.msra.mxu0 0
    %410 = vmatprep.subr.bf16.mxu0 0
    %411 = vmatpush1.bf16.msra.mxu0 0
    %412 = vmatprep.subr.bf16.mxu0 0
    %413 = vmatpush1.bf16.msra.mxu0 0
    %414 = vmatprep.subr.bf16.mxu0 0
    %415 = vmatpush1.bf16.msra.mxu0 0
    %416 = vmatprep.subr.bf16.mxu0 0
    %417 = vmatpush1.bf16.msra.mxu0 0
    %418 = vmatprep.subr.bf16.mxu0 0
    %419 = vmatpush1.bf16.msra.mxu0 0
    %420 = vmatprep.subr.bf16.mxu0 0
    %421 = vmatpush1.bf16.msra.mxu0 0
    %422 = vmatprep.subr.bf16.mxu0 0
    %423 = vmatpush1.bf16.msra.mxu0 0
    %424 = vmatprep.subr.bf16.mxu0 0
    %425 = vmatpush1.bf16.msra.mxu0 0
    %426 = vmatprep.subr.bf16.mxu0 0
    %427 = vmatpush1.bf16.msra.mxu0 0
    %428 = vmatprep.mubr.bf16.mxu0 0
    %429 = vmatmul.mubr.bf16.gmra.mrb[0].mxu0 %v394
    %v430 = vpop.f32.mrb[0].mxu0
    %v431 = vadd.f32 0.0, %v430
    %v432 = vpop.f32.mrb[0].mxu0
    %v433 = vadd.f32 0.0, %v432
    %v434 = vpop.f32.mrb[0].mxu0
    %v435 = vpop.f32.mrb[0].mxu0
    %436 = vdwg.mxu0
    %v439 = vrot.slane %v431, 4
    %v440 = vrot.slane %v433, 4
    %v443 = vadd.f32 %v254, %v439
    %v444 = vadd.f32 %v256, %v440
    %v445 = vxor.u32 %v443, 2147483648
    %v446 = vmul.f32 %v445, 1.442695
    %v447 = vpow.pop %v446
    %v448 = vadd.f32 %v447, 1.0
    %v449 = vrcp.pop %v448
    %v450 = vmul.f32 1.0, %v449
    %v451 = vtanh.pop %v444
    %v452 = vxor.u32 %v444, 2147483648
    %v453 = vmul.f32 %v452, 1.442695
    %v454 = vpow.pop %v453
    %v455 = vadd.f32 %v454, 1.0
    %v456 = vrcp.pop %v455
    %v457 = vmul.f32 1.0, %v456
    %v459 = vrot.slane %v386, 4
    %v461 = vmul.f32 %v450, %v459
    %v462 = vmul.f32 %v450, %v451
    %464 = vrot.lane.b32.xlu0 %v462, 64
    %v465 = vpop.permute.xlu0 %464
    %v467 = vadd.f32 %v461, %v465
    %v468 = vtanh.pop %v467
    %v469 = vmul.f32 %v457, %v468
    %v470 = vpack.c.bf16 %v469, %v469
    %v472 = vrot.slane %v470, 2
    %473 = vrot.lane.b32.xlu0 %v472, 64
    %v474 = vpop.permute.xlu0 %473
    %v476 = vsel %vm320, %v474, 0
    %478 = vmatprep.subr.bf16.mxu0 %v305
    %479 = vmatpush1.bf16.msra.mxu0 %v304
    %480 = vmatprep.subr.bf16.mxu0 %v307
    %481 = vmatpush1.bf16.msra.mxu0 %v306
    %482 = vmatprep.subr.bf16.mxu0 %v309
    %483 = vmatpush1.bf16.msra.mxu0 %v308
    %484 = vmatprep.subr.bf16.mxu0 %v311
    %485 = vmatpush1.bf16.msra.mxu0 %v310
    %486 = vmatprep.subr.bf16.mxu0 0
    %487 = vmatpush1.bf16.msra.mxu0 0
    %488 = vmatprep.subr.bf16.mxu0 0
    %489 = vmatpush1.bf16.msra.mxu0 0
    %490 = vmatprep.subr.bf16.mxu0 0
    %491 = vmatpush1.bf16.msra.mxu0 0
    %492 = vmatprep.subr.bf16.mxu0 0
    %493 = vmatpush1.bf16.msra.mxu0 0
    %494 = vmatprep.subr.bf16.mxu0 0
    %495 = vmatpush1.bf16.msra.mxu0 0
    %496 = vmatprep.subr.bf16.mxu0 0
    %497 = vmatpush1.bf16.msra.mxu0 0
    %498 = vmatprep.subr.bf16.mxu0 0
    %499 = vmatpush1.bf16.msra.mxu0 0
    %500 = vmatprep.subr.bf16.mxu0 0
    %501 = vmatpush1.bf16.msra.mxu0 0
    %502 = vmatprep.subr.bf16.mxu0 0
    %503 = vmatpush1.bf16.msra.mxu0 0
    %504 = vmatprep.subr.bf16.mxu0 0
    %505 = vmatpush1.bf16.msra.mxu0 0
    %506 = vmatprep.subr.bf16.mxu0 0
    %507 = vmatpush1.bf16.msra.mxu0 0
    %508 = vmatprep.subr.bf16.mxu0 0
    %509 = vmatpush1.bf16.msra.mxu0 0
    %510 = vmatprep.mubr.bf16.mxu0 0
    %511 = vmatmul.mubr.bf16.gmra.mrb[0].mxu0 %v476
    %v512 = vpop.f32.mrb[0].mxu0
    %v513 = vadd.f32 0.0, %v512
    %v514 = vpop.f32.mrb[0].mxu0
    %v515 = vadd.f32 0.0, %v514
    %v516 = vpop.f32.mrb[0].mxu0
    %v517 = vpop.f32.mrb[0].mxu0
    %518 = vdwg.mxu0
    %v519 = vadd.f32 %v258, %v513
    %v520 = vadd.f32 %v260, %v515
    %v521 = vxor.u32 %v519, 2147483648
    %v522 = vmul.f32 %v521, 1.442695
    %v523 = vpow.pop %v522
    %v524 = vadd.f32 %v523, 1.0
    %v525 = vrcp.pop %v524
    %v526 = vmul.f32 1.0, %v525
    %v527 = vtanh.pop %v520
    %v528 = vxor.u32 %v520, 2147483648
    %v529 = vmul.f32 %v528, 1.442695
    %v530 = vpow.pop %v529
    %v531 = vadd.f32 %v530, 1.0
    %v532 = vrcp.pop %v531
    %v533 = vmul.f32 1.0, %v532
    %v535 = vrot.slane %v467, 4
    %v537 = vmul.f32 %v526, %v535
    %v538 = vmul.f32 %v526, %v527
    %540 = vrot.lane.b32.xlu0 %v538, 64
    %v541 = vpop.permute.xlu0 %540
    %v543 = vadd.f32 %v537, %v541
    %v544 = vtanh.pop %v543
    %v545 = vmul.f32 %v533, %v544
    %v546 = vpack.c.bf16 %v545, %v545
    %548 = vrot.lane.b32.xlu0 %v546, 64
    %v549 = vpop.permute.xlu0 %548
    %v551 = vsel %vm320, %v549, 0
    %553 = vmatprep.subr.bf16.mxu0 %v305
    %554 = vmatpush1.bf16.msra.mxu0 %v304
    %555 = vmatprep.subr.bf16.mxu0 %v307
    %556 = vmatpush1.bf16.msra.mxu0 %v306
    %557 = vmatprep.subr.bf16.mxu0 %v309
    %558 = vmatpush1.bf16.msra.mxu0 %v308
    %559 = vmatprep.subr.bf16.mxu0 %v311
    %560 = vmatpush1.bf16.msra.mxu0 %v310
    %561 = vmatprep.subr.bf16.mxu0 0
    %562 = vmatpush1.bf16.msra.mxu0 0
    %563 = vmatprep.subr.bf16.mxu0 0
    %564 = vmatpush1.bf16.msra.mxu0 0
    %565 = vmatprep.subr.bf16.mxu0 0
    %566 = vmatpush1.bf16.msra.mxu0 0
    %567 = vmatprep.subr.bf16.mxu0 0
    %568 = vmatpush1.bf16.msra.mxu0 0
    %569 = vmatprep.subr.bf16.mxu0 0
    %570 = vmatpush1.bf16.msra.mxu0 0
    %571 = vmatprep.subr.bf16.mxu0 0
    %572 = vmatpush1.bf16.msra.mxu0 0
    %573 = vmatprep.subr.bf16.mxu0 0
    %574 = vmatpush1.bf16.msra.mxu0 0
    %575 = vmatprep.subr.bf16.mxu0 0
    %576 = vmatpush1.bf16.msra.mxu0 0
    %577 = vmatprep.subr.bf16.mxu0 0
    %578 = vmatpush1.bf16.msra.mxu0 0
    %579 = vmatprep.subr.bf16.mxu0 0
    %580 = vmatpush1.bf16.msra.mxu0 0
    %581 = vmatprep.subr.bf16.mxu0 0
    %582 = vmatpush1.bf16.msra.mxu0 0
    %583 = vmatprep.subr.bf16.mxu0 0
    %584 = vmatpush1.bf16.msra.mxu0 0
    %585 = vmatprep.mubr.bf16.mxu0 0
    %586 = vmatmul.mubr.bf16.gmra.mrb[0].mxu0 %v551
    %v587 = vpop.f32.mrb[0].mxu0
    %v588 = vadd.f32 0.0, %v587
    %v589 = vpop.f32.mrb[0].mxu0
    %v590 = vadd.f32 0.0, %v589
    %v591 = vpop.f32.mrb[0].mxu0
    %v592 = vpop.f32.mrb[0].mxu0
    %593 = vdwg.mxu0
    %v596 = vrot.slane %v588, 4
    %v597 = vrot.slane %v590, 4
    %v600 = vadd.f32 %v258, %v596
    %v601 = vadd.f32 %v260, %v597
    %v602 = vxor.u32 %v600, 2147483648
    %v603 = vmul.f32 %v602, 1.442695
    %v604 = vpow.pop %v603
    %v605 = vadd.f32 %v604, 1.0
    %v606 = vrcp.pop %v605
    %v607 = vmul.f32 1.0, %v606
    %v608 = vtanh.pop %v601
    %v609 = vxor.u32 %v601, 2147483648
    %v610 = vmul.f32 %v609, 1.442695
    %v611 = vpow.pop %v610
    %v612 = vadd.f32 %v611, 1.0
    %v613 = vrcp.pop %v612
    %v614 = vmul.f32 1.0, %v613
    %v616 = vrot.slane %v543, 4
    %v618 = vmul.f32 %v607, %v616
    %v619 = vmul.f32 %v607, %v608
    %621 = vrot.lane.b32.xlu0 %v619, 64
    %v622 = vpop.permute.xlu0 %621
    %v624 = vadd.f32 %v618, %v622
    %v625 = vtanh.pop %v624
    %v626 = vmul.f32 %v614, %v625
    %v627 = vpack.c.bf16 %v626, %v626
    %v629 = vrot.slane %v627, 2
    %630 = vrot.lane.b32.xlu0 %v629, 64
    %v631 = vpop.permute.xlu0 %630
    %v633 = vsel %vm320, %v631, 0
    %635 = vmatprep.subr.bf16.mxu0 %v305
    %636 = vmatpush1.bf16.msra.mxu0 %v304
    %637 = vmatprep.subr.bf16.mxu0 %v307
    %638 = vmatpush1.bf16.msra.mxu0 %v306
    %639 = vmatprep.subr.bf16.mxu0 %v309
    %640 = vmatpush1.bf16.msra.mxu0 %v308
    %641 = vmatprep.subr.bf16.mxu0 %v311
    %642 = vmatpush1.bf16.msra.mxu0 %v310
    %643 = vmatprep.subr.bf16.mxu0 0
    %644 = vmatpush1.bf16.msra.mxu0 0
    %645 = vmatprep.subr.bf16.mxu0 0
    %646 = vmatpush1.bf16.msra.mxu0 0
    %647 = vmatprep.subr.bf16.mxu0 0
    %648 = vmatpush1.bf16.msra.mxu0 0
    %649 = vmatprep.subr.bf16.mxu0 0
    %650 = vmatpush1.bf16.msra.mxu0 0
    %651 = vmatprep.subr.bf16.mxu0 0
    %652 = vmatpush1.bf16.msra.mxu0 0
    %653 = vmatprep.subr.bf16.mxu0 0
    %654 = vmatpush1.bf16.msra.mxu0 0
    %655 = vmatprep.subr.bf16.mxu0 0
    %656 = vmatpush1.bf16.msra.mxu0 0
    %657 = vmatprep.subr.bf16.mxu0 0
    %658 = vmatpush1.bf16.msra.mxu0 0
    %659 = vmatprep.subr.bf16.mxu0 0
    %660 = vmatpush1.bf16.msra.mxu0 0
    %661 = vmatprep.subr.bf16.mxu0 0
    %662 = vmatpush1.bf16.msra.mxu0 0
    %663 = vmatprep.subr.bf16.mxu0 0
    %664 = vmatpush1.bf16.msra.mxu0 0
    %665 = vmatprep.subr.bf16.mxu0 0
    %666 = vmatpush1.bf16.msra.mxu0 0
    %667 = vmatprep.mubr.bf16.mxu0 0
    %668 = vmatmul.mubr.bf16.gmra.mrb[0].mxu0 %v633
    %v669 = vpop.f32.mrb[0].mxu0
    %v670 = vadd.f32 0.0, %v669
    %v671 = vpop.f32.mrb[0].mxu0
    %v672 = vadd.f32 0.0, %v671
    %v673 = vpop.f32.mrb[0].mxu0
    %v674 = vpop.f32.mrb[0].mxu0
    %675 = vdwg.mxu0
    %v676 = vadd.f32 %v264, %v670
    %v677 = vadd.f32 %v266, %v672
    %v678 = vxor.u32 %v676, 2147483648
    %v679 = vmul.f32 %v678, 1.442695
    %v680 = vpow.pop %v679
    %v681 = vadd.f32 %v680, 1.0
    %v682 = vrcp.pop %v681
    %v683 = vmul.f32 1.0, %v682
    %v684 = vtanh.pop %v677
    %v685 = vxor.u32 %v677, 2147483648
    %v686 = vmul.f32 %v685, 1.442695
    %v687 = vpow.pop %v686
    %v688 = vadd.f32 %v687, 1.0
    %v689 = vrcp.pop %v688
    %v690 = vmul.f32 1.0, %v689
    %v692 = vrot.slane %v624, 4
    %v694 = vmul.f32 %v683, %v692
    %v695 = vmul.f32 %v683, %v684
    %697 = vrot.lane.b32.xlu0 %v695, 64
    %v698 = vpop.permute.xlu0 %697
    %v700 = vadd.f32 %v694, %v698
    %v701 = vtanh.pop %v700
    %v702 = vmul.f32 %v690, %v701
    %v703 = vpack.c.bf16 %v702, %v702
    %705 = vrot.lane.b32.xlu0 %v703, 64
    %v706 = vpop.permute.xlu0 %705
    %v708 = vsel %vm320, %v706, 0
    %710 = vmatprep.subr.bf16.mxu0 %v305
    %711 = vmatpush1.bf16.msra.mxu0 %v304
    %712 = vmatprep.subr.bf16.mxu0 %v307
    %713 = vmatpush1.bf16.msra.mxu0 %v306
    %714 = vmatprep.subr.bf16.mxu0 %v309
    %715 = vmatpush1.bf16.msra.mxu0 %v308
    %716 = vmatprep.subr.bf16.mxu0 %v311
    %717 = vmatpush1.bf16.msra.mxu0 %v310
    %718 = vmatprep.subr.bf16.mxu0 0
    %719 = vmatpush1.bf16.msra.mxu0 0
    %720 = vmatprep.subr.bf16.mxu0 0
    %721 = vmatpush1.bf16.msra.mxu0 0
    %722 = vmatprep.subr.bf16.mxu0 0
    %723 = vmatpush1.bf16.msra.mxu0 0
    %724 = vmatprep.subr.bf16.mxu0 0
    %725 = vmatpush1.bf16.msra.mxu0 0
    %726 = vmatprep.subr.bf16.mxu0 0
    %727 = vmatpush1.bf16.msra.mxu0 0
    %728 = vmatprep.subr.bf16.mxu0 0
    %729 = vmatpush1.bf16.msra.mxu0 0
    %730 = vmatprep.subr.bf16.mxu0 0
    %731 = vmatpush1.bf16.msra.mxu0 0
    %732 = vmatprep.subr.bf16.mxu0 0
    %733 = vmatpush1.bf16.msra.mxu0 0
    %734 = vmatprep.subr.bf16.mxu0 0
    %735 = vmatpush1.bf16.msra.mxu0 0
    %736 = vmatprep.subr.bf16.mxu0 0
    %737 = vmatpush1.bf16.msra.mxu0 0
    %738 = vmatprep.subr.bf16.mxu0 0
    %739 = vmatpush1.bf16.msra.mxu0 0
    %740 = vmatprep.subr.bf16.mxu0 0
    %741 = vmatpush1.bf16.msra.mxu0 0
    %742 = vmatprep.mubr.bf16.mxu0 0
    %743 = vmatmul.mubr.bf16.gmra.mrb[0].mxu0 %v708
    %v744 = vpop.f32.mrb[0].mxu0
    %v745 = vadd.f32 0.0, %v744
    %v746 = vpop.f32.mrb[0].mxu0
    %v747 = vadd.f32 0.0, %v746
    %v748 = vpop.f32.mrb[0].mxu0
    %v749 = vpop.f32.mrb[0].mxu0
    %750 = vdwg.mxu0
    %v753 = vrot.slane %v745, 4
    %v754 = vrot.slane %v747, 4
    %v757 = vadd.f32 %v264, %v753
    %v758 = vadd.f32 %v266, %v754
    %v759 = vxor.u32 %v757, 2147483648
    %v760 = vmul.f32 %v759, 1.442695
    %v761 = vpow.pop %v760
    %v762 = vadd.f32 %v761, 1.0
    %v763 = vrcp.pop %v762
    %v764 = vmul.f32 1.0, %v763
    %v765 = vtanh.pop %v758
    %v766 = vxor.u32 %v758, 2147483648
    %v767 = vmul.f32 %v766, 1.442695
    %v768 = vpow.pop %v767
    %v769 = vadd.f32 %v768, 1.0
    %v770 = vrcp.pop %v769
    %v771 = vmul.f32 1.0, %v770
    %v773 = vrot.slane %v700, 4
    %v775 = vmul.f32 %v764, %v773
    %v776 = vmul.f32 %v764, %v765
    %778 = vrot.lane.b32.xlu0 %v776, 64
    %v779 = vpop.permute.xlu0 %778
    %v781 = vadd.f32 %v775, %v779
    %v782 = vtanh.pop %v781
    %v783 = vmul.f32 %v771, %v782
    %v784 = vpack.c.bf16 %v783, %v783
    %v786 = vrot.slane %v784, 2
    %787 = vrot.lane.b32.xlu0 %v786, 64
    %v788 = vpop.permute.xlu0 %787
    %v790 = vsel %vm320, %v788, 0
    %792 = vmatprep.subr.bf16.mxu0 %v305
    %793 = vmatpush1.bf16.msra.mxu0 %v304
    %794 = vmatprep.subr.bf16.mxu0 %v307
    %795 = vmatpush1.bf16.msra.mxu0 %v306
    %796 = vmatprep.subr.bf16.mxu0 %v309
    %797 = vmatpush1.bf16.msra.mxu0 %v308
    %798 = vmatprep.subr.bf16.mxu0 %v311
    %799 = vmatpush1.bf16.msra.mxu0 %v310
    %800 = vmatprep.subr.bf16.mxu0 0
    %801 = vmatpush1.bf16.msra.mxu0 0
    %802 = vmatprep.subr.bf16.mxu0 0
    %803 = vmatpush1.bf16.msra.mxu0 0
    %804 = vmatprep.subr.bf16.mxu0 0
    %805 = vmatpush1.bf16.msra.mxu0 0
    %806 = vmatprep.subr.bf16.mxu0 0
    %807 = vmatpush1.bf16.msra.mxu0 0
    %808 = vmatprep.subr.bf16.mxu0 0
    %809 = vmatpush1.bf16.msra.mxu0 0
    %810 = vmatprep.subr.bf16.mxu0 0
    %811 = vmatpush1.bf16.msra.mxu0 0
    %812 = vmatprep.subr.bf16.mxu0 0
    %813 = vmatpush1.bf16.msra.mxu0 0
    %814 = vmatprep.subr.bf16.mxu0 0
    %815 = vmatpush1.bf16.msra.mxu0 0
    %816 = vmatprep.subr.bf16.mxu0 0
    %817 = vmatpush1.bf16.msra.mxu0 0
    %818 = vmatprep.subr.bf16.mxu0 0
    %819 = vmatpush1.bf16.msra.mxu0 0
    %820 = vmatprep.subr.bf16.mxu0 0
    %821 = vmatpush1.bf16.msra.mxu0 0
    %822 = vmatprep.subr.bf16.mxu0 0
    %823 = vmatpush1.bf16.msra.mxu0 0
    %824 = vmatprep.mubr.bf16.mxu0 0
    %825 = vmatmul.mubr.bf16.gmra.mrb[0].mxu0 %v790
    %v826 = vpop.f32.mrb[0].mxu0
    %v827 = vadd.f32 0.0, %v826
    %v828 = vpop.f32.mrb[0].mxu0
    %v829 = vadd.f32 0.0, %v828
    %v830 = vpop.f32.mrb[0].mxu0
    %v831 = vpop.f32.mrb[0].mxu0
    %832 = vdwg.mxu0
    %v833 = vadd.f32 %v268, %v827
    %v834 = vadd.f32 %v270, %v829
    %v835 = vxor.u32 %v833, 2147483648
    %v836 = vmul.f32 %v835, 1.442695
    %v837 = vpow.pop %v836
    %v838 = vadd.f32 %v837, 1.0
    %v839 = vrcp.pop %v838
    %v840 = vmul.f32 1.0, %v839
    %v841 = vtanh.pop %v834
    %v842 = vxor.u32 %v834, 2147483648
    %v843 = vmul.f32 %v842, 1.442695
    %v844 = vpow.pop %v843
    %v845 = vadd.f32 %v844, 1.0
    %v846 = vrcp.pop %v845
    %v847 = vmul.f32 1.0, %v846
    %v849 = vrot.slane %v781, 4
    %v851 = vmul.f32 %v840, %v849
    %v852 = vmul.f32 %v840, %v841
    %854 = vrot.lane.b32.xlu0 %v852, 64
    %v855 = vpop.permute.xlu0 %854
    %v857 = vadd.f32 %v851, %v855
    %v858 = vtanh.pop %v857
    %v859 = vmul.f32 %v847, %v858
    %v860 = vpack.c.bf16 %v859, %v859
    %862 = vrot.lane.b32.xlu0 %v860, 64
    %v863 = vpop.permute.xlu0 %862
    %v865 = vsel %vm320, %v863, 0
    %867 = vmatprep.subr.bf16.mxu0 %v305
    %868 = vmatpush1.bf16.msra.mxu0 %v304
    %869 = vmatprep.subr.bf16.mxu0 %v307
    %870 = vmatpush1.bf16.msra.mxu0 %v306
    %871 = vmatprep.subr.bf16.mxu0 %v309
    %872 = vmatpush1.bf16.msra.mxu0 %v308
    %873 = vmatprep.subr.bf16.mxu0 %v311
    %874 = vmatpush1.bf16.msra.mxu0 %v310
    %875 = vmatprep.subr.bf16.mxu0 0
    %876 = vmatpush1.bf16.msra.mxu0 0
    %877 = vmatprep.subr.bf16.mxu0 0
    %878 = vmatpush1.bf16.msra.mxu0 0
    %879 = vmatprep.subr.bf16.mxu0 0
    %880 = vmatpush1.bf16.msra.mxu0 0
    %881 = vmatprep.subr.bf16.mxu0 0
    %882 = vmatpush1.bf16.msra.mxu0 0
    %883 = vmatprep.subr.bf16.mxu0 0
    %884 = vmatpush1.bf16.msra.mxu0 0
    %885 = vmatprep.subr.bf16.mxu0 0
    %886 = vmatpush1.bf16.msra.mxu0 0
    %887 = vmatprep.subr.bf16.mxu0 0
    %888 = vmatpush1.bf16.msra.mxu0 0
    %889 = vmatprep.subr.bf16.mxu0 0
    %890 = vmatpush1.bf16.msra.mxu0 0
    %891 = vmatprep.subr.bf16.mxu0 0
    %892 = vmatpush1.bf16.msra.mxu0 0
    %893 = vmatprep.subr.bf16.mxu0 0
    %894 = vmatpush1.bf16.msra.mxu0 0
    %895 = vmatprep.subr.bf16.mxu0 0
    %896 = vmatpush1.bf16.msra.mxu0 0
    %897 = vmatprep.subr.bf16.mxu0 0
    %898 = vmatpush1.bf16.msra.mxu0 0
    %899 = vmatprep.mubr.bf16.mxu0 0
    %900 = vmatmul.mubr.bf16.gmra.mrb[0].mxu0 %v865
    %v901 = vpop.f32.mrb[0].mxu0
    %v902 = vadd.f32 0.0, %v901
    %v903 = vpop.f32.mrb[0].mxu0
    %v904 = vadd.f32 0.0, %v903
    %v905 = vpop.f32.mrb[0].mxu0
    %v906 = vpop.f32.mrb[0].mxu0
    %907 = vdwg.mxu0
    %v910 = vrot.slane %v902, 4
    %v911 = vrot.slane %v904, 4
    %v914 = vadd.f32 %v268, %v910
    %v915 = vadd.f32 %v270, %v911
    %v916 = vxor.u32 %v914, 2147483648
    %v917 = vmul.f32 %v916, 1.442695
    %v918 = vpow.pop %v917
    %v919 = vadd.f32 %v918, 1.0
    %v920 = vrcp.pop %v919
    %v921 = vmul.f32 1.0, %v920
    %v922 = vtanh.pop %v915
    %v923 = vxor.u32 %v915, 2147483648
    %v924 = vmul.f32 %v923, 1.442695
    %v925 = vpow.pop %v924
    %v926 = vadd.f32 %v925, 1.0
    %v927 = vrcp.pop %v926
    %v928 = vmul.f32 1.0, %v927
    %v930 = vrot.slane %v857, 4
    %v932 = vmul.f32 %v921, %v930
    %v933 = vmul.f32 %v921, %v922
    %935 = vrot.lane.b32.xlu0 %v933, 64
    %v936 = vpop.permute.xlu0 %935
    %v938 = vadd.f32 %v932, %v936
    %v939 = vtanh.pop %v938
    %v940 = vmul.f32 %v928, %v939
    %942 = vrot.lane.b32.xlu0 %v388, 64
    %v943 = vpop.permute.xlu0 %942
    %v946 = vrot.slane %v940, 4
    %v948 = vsel %vm320, %v943, %v946
    %950 = vrot.lane.b32.xlu0 %v469, 64
    %v951 = vpop.permute.xlu0 %950
    %v954 = vrot.slane %v859, 4
    %v956 = vsel %vm320, %v951, %v954
    %958 = vrot.lane.b32.xlu0 %v545, 64
    %v959 = vpop.permute.xlu0 %958
    %v962 = vrot.slane %v783, 4
    %v964 = vsel %vm320, %v959, %v962
    %966 = vrot.lane.b32.xlu0 %v626, 64
    %v967 = vpop.permute.xlu0 %966
    %v970 = vrot.slane %v702, 4
    %v972 = vsel %vm320, %v967, %v970
    %973 = vrot.lane.b32.xlu0 %v702, 64
    %v974 = vpop.permute.xlu0 %973
    %v976 = vrot.slane %v626, 4
    %v978 = vsel %vm320, %v974, %v976
    %979 = vrot.lane.b32.xlu0 %v783, 64
    %v980 = vpop.permute.xlu0 %979
    %v982 = vrot.slane %v545, 4
    %v984 = vsel %vm320, %v980, %v982
    %985 = vrot.lane.b32.xlu0 %v859, 64
    %v986 = vpop.permute.xlu0 %985
    %v988 = vrot.slane %v469, 4
    %v990 = vsel %vm320, %v986, %v988
    %991 = vrot.lane.b32.xlu0 %v940, 64
    %v992 = vpop.permute.xlu0 %991
    %v994 = vrot.slane %v388, 4
    %v996 = vsel %vm320, %v992, %v994
    %v997 = vsel %vm169, %v948, %v956
    %v998 = vsel %vm169, %v964, %v972
    %v999 = vsel %vm169, %v978, %v984
    %v1000 = vsel %vm169, %v990, %v996
    %v1001 = vpack.c.bf16 %v998, %v997
    %v1002 = vpack.c.bf16 %v1000, %v999
    %v1003 = vld [vmem:[#allocation7] sm:$0xf]
    %v1004 = vld [vmem:[#allocation7 + $0x4] sm:$0xf]
    %v1005 = vld [vmem:[#allocation7 + $0x8] sm:$0xf]
    %v1006 = vld [vmem:[#allocation7 + $0xc] sm:$0xf]
    %v1007 = vld [vmem:[#allocation7 + $0x10] sm:$0xf]
    %v1008 = vld [vmem:[#allocation7 + $0x14] sm:$0xf]
    %v1009 = vld [vmem:[#allocation7 + $0x18] sm:$0xf]
    %v1010 = vld [vmem:[#allocation7 + $0x1c] sm:$0xf]
    %v1011 = vld [vmem:[#allocation7 + $0x20] sm:$0xf]
    %v1012 = vld [vmem:[#allocation7 + $0x24] sm:$0xf]
    %v1013 = vld [vmem:[#allocation7 + $0x28] sm:$0xf]
    %v1014 = vld [vmem:[#allocation7 + $0x2c] sm:$0xf]
    %v1015 = vld [vmem:[#allocation7 + $0x30] sm:$0xf]
    %v1016 = vld [vmem:[#allocation7 + $0x34] sm:$0xf]
    %v1017 = vld [vmem:[#allocation7 + $0x38] sm:$0xf]
    %v1018 = vld [vmem:[#allocation7 + $0x3c] sm:$0xf]
    %v1019 = vld [vmem:[%s6] sm:$0x1]
    %v1021 = vlaneseq
    %v1022 = vshrl.u32 %v1021, 7
    %v1023 = vsub.s32 0, %v1022
    %v1024 = vrot.slane %v1019, %v1023
    %v1042 = vunpack.c.l.b16 %v1003
    %v1043 = vunpack.c.l.b16 %v1004
    %v1044 = vunpack.c.l.b16 %v1005
    %v1045 = vunpack.c.l.b16 %v1006
    %v1046 = vunpack.c.l.b16 %v1007
    %v1047 = vunpack.c.l.b16 %v1008
    %v1048 = vunpack.c.l.b16 %v1009
    %v1049 = vunpack.c.l.b16 %v1010
    %v1050 = vunpack.c.l.b16 %v1011
    %v1051 = vunpack.c.l.b16 %v1012
    %v1052 = vunpack.c.l.b16 %v1013
    %v1053 = vunpack.c.l.b16 %v1014
    %v1054 = vunpack.c.l.b16 %v1015
    %v1055 = vunpack.c.l.b16 %v1016
    %v1056 = vunpack.c.l.b16 %v1017
    %v1057 = vunpack.c.l.b16 %v1018
    %v1058 = vpack.c.b16 %v1043, %v1042
    %v1059 = vpack.c.b16 %v1045, %v1044
    %v1060 = vpack.c.b16 %v1047, %v1046
    %v1061 = vpack.c.b16 %v1049, %v1048
    %v1062 = vpack.c.b16 %v1051, %v1050
    %v1063 = vpack.c.b16 %v1053, %v1052
    %v1064 = vpack.c.b16 %v1055, %v1054
    %v1065 = vpack.c.b16 %v1057, %v1056
    %1074 = vmatprep.subr.bf16.mxu0 0
    %1075 = vmatpush1.bf16.msra.mxu0 %v1058
    %1076 = vmatprep.subr.bf16.mxu0 0
    %1077 = vmatpush1.bf16.msra.mxu0 %v1059
    %1078 = vmatprep.subr.bf16.mxu0 0
    %1079 = vmatpush1.bf16.msra.mxu0 %v1060
    %1080 = vmatprep.subr.bf16.mxu0 0
    %1081 = vmatpush1.bf16.msra.mxu0 %v1061
    %1082 = vmatprep.subr.bf16.mxu0 0
    %1083 = vmatpush1.bf16.msra.mxu0 %v1062
    %1084 = vmatprep.subr.bf16.mxu0 0
    %1085 = vmatpush1.bf16.msra.mxu0 %v1063
    %1086 = vmatprep.subr.bf16.mxu0 0
    %1087 = vmatpush1.bf16.msra.mxu0 %v1064
    %1088 = vmatprep.subr.bf16.mxu0 0
    %1089 = vmatpush1.bf16.msra.mxu0 %v1065
    %1090 = vmatprep.subr.bf16.mxu0 0
    %1091 = vmatpush1.bf16.msra.mxu0 0
    %1092 = vmatprep.subr.bf16.mxu0 0
    %1093 = vmatpush1.bf16.msra.mxu0 0
    %1094 = vmatprep.subr.bf16.mxu0 0
    %1095 = vmatpush1.bf16.msra.mxu0 0
    %1096 = vmatprep.subr.bf16.mxu0 0
    %1097 = vmatpush1.bf16.msra.mxu0 0
    %1098 = vmatprep.subr.bf16.mxu0 0
    %1099 = vmatpush1.bf16.msra.mxu0 0
    %1100 = vmatprep.subr.bf16.mxu0 0
    %1101 = vmatpush1.bf16.msra.mxu0 0
    %1102 = vmatprep.subr.bf16.mxu0 0
    %1103 = vmatpush1.bf16.msra.mxu0 0
    %1104 = vmatprep.subr.bf16.mxu0 0
    %1105 = vmatpush1.bf16.msra.mxu0 0
    %1106 = vmatprep.mubr.bf16.mxu0 0
    %1107 = vmatmul.mubr.bf16.gmra.mrb[0].mxu0 %v1001
    %v1108 = vpop.f32.mrb[0].mxu0
    %v1109 = vadd.f32 %v1024, %v1108
    %v1110 = vpop.f32.mrb[0].mxu0
    %v1111 = vpop.f32.mrb[0].mxu0
    %v1112 = vadd.f32 %v1024, %v1111
    %v1113 = vpop.f32.mrb[0].mxu0
    %1114 = vmatprep.mubr.bf16.mxu0 0
    %1115 = vmatmul.mubr.bf16.gmra.mrb[0].mxu0 %v1002
    %v1116 = vpop.f32.mrb[0].mxu0
    %v1117 = vadd.f32 %v1024, %v1116
    %v1118 = vpop.f32.mrb[0].mxu0
    %v1119 = vpop.f32.mrb[0].mxu0
    %v1120 = vadd.f32 %v1024, %v1119
    %v1121 = vpop.f32.mrb[0].mxu0
    %1122 = vdwg.mxu0
    %v1123 = vld [vmem:[#allocation10] sm:$0xf]
    %v1124 = vld [vmem:[#allocation10 + $0x4] sm:$0xf]
    %v1125 = vld [vmem:[#allocation10 + $0x8] sm:$0xf]
    %v1126 = vld [vmem:[#allocation10 + $0xc] sm:$0xf]
    %v1127 = vld [vmem:[#allocation10 + $0x10] sm:$0xf]
    %v1128 = vld [vmem:[#allocation10 + $0x14] sm:$0xf]
    %v1129 = vld [vmem:[#allocation10 + $0x18] sm:$0xf]
    %v1130 = vld [vmem:[#allocation10 + $0x1c] sm:$0xf]
    %v1131 = vld [vmem:[#allocation10 + $0x20] sm:$0xf]
    %v1132 = vld [vmem:[#allocation10 + $0x24] sm:$0xf]
    %v1133 = vld [vmem:[#allocation10 + $0x28] sm:$0xf]
    %v1134 = vld [vmem:[#allocation10 + $0x2c] sm:$0xf]
    %v1135 = vld [vmem:[#allocation10 + $0x30] sm:$0xf]
    %v1136 = vld [vmem:[#allocation10 + $0x34] sm:$0xf]
    %v1137 = vld [vmem:[#allocation10 + $0x38] sm:$0xf]
    %v1138 = vld [vmem:[#allocation10 + $0x3c] sm:$0xf]
    %v1139 = vld [vmem:[%s8] sm:$0x1]
    %v1141 = vlaneseq
    %v1142 = vshrl.u32 %v1141, 7
    %v1143 = vsub.s32 0, %v1142
    %v1144 = vrot.slane %v1139, %v1143
    %v1162 = vunpack.c.l.b16 %v1123
    %v1163 = vunpack.c.l.b16 %v1124
    %v1164 = vunpack.c.l.b16 %v1125
    %v1165 = vunpack.c.l.b16 %v1126
    %v1166 = vunpack.c.l.b16 %v1127
    %v1167 = vunpack.c.l.b16 %v1128
    %v1168 = vunpack.c.l.b16 %v1129
    %v1169 = vunpack.c.l.b16 %v1130
    %v1170 = vunpack.c.l.b16 %v1131
    %v1171 = vunpack.c.l.b16 %v1132
    %v1172 = vunpack.c.l.b16 %v1133
    %v1173 = vunpack.c.l.b16 %v1134
    %v1174 = vunpack.c.l.b16 %v1135
    %v1175 = vunpack.c.l.b16 %v1136
    %v1176 = vunpack.c.l.b16 %v1137
    %v1177 = vunpack.c.l.b16 %v1138
    %v1178 = vpack.c.b16 %v1163, %v1162
    %v1179 = vpack.c.b16 %v1165, %v1164
    %v1180 = vpack.c.b16 %v1167, %v1166
    %v1181 = vpack.c.b16 %v1169, %v1168
    %v1182 = vpack.c.b16 %v1171, %v1170
    %v1183 = vpack.c.b16 %v1173, %v1172
    %v1184 = vpack.c.b16 %v1175, %v1174
    %v1185 = vpack.c.b16 %v1177, %v1176
    %1194 = vmatprep.subr.bf16.mxu0 0
    %1195 = vmatpush1.bf16.msra.mxu0 %v1178
    %1196 = vmatprep.subr.bf16.mxu0 0
    %1197 = vmatpush1.bf16.msra.mxu0 %v1179
    %1198 = vmatprep.subr.bf16.mxu0 0
    %1199 = vmatpush1.bf16.msra.mxu0 %v1180
    %1200 = vmatprep.subr.bf16.mxu0 0
    %1201 = vmatpush1.bf16.msra.mxu0 %v1181
    %1202 = vmatprep.subr.bf16.mxu0 0
    %1203 = vmatpush1.bf16.msra.mxu0 %v1182
    %1204 = vmatprep.subr.bf16.mxu0 0
    %1205 = vmatpush1.bf16.msra.mxu0 %v1183
    %1206 = vmatprep.subr.bf16.mxu0 0
    %1207 = vmatpush1.bf16.msra.mxu0 %v1184
    %1208 = vmatprep.subr.bf16.mxu0 0
    %1209 = vmatpush1.bf16.msra.mxu0 %v1185
    %1210 = vmatprep.subr.bf16.mxu0 0
    %1211 = vmatpush1.bf16.msra.mxu0 0
    %1212 = vmatprep.subr.bf16.mxu0 0
    %1213 = vmatpush1.bf16.msra.mxu0 0
    %1214 = vmatprep.subr.bf16.mxu0 0
    %1215 = vmatpush1.bf16.msra.mxu0 0
    %1216 = vmatprep.subr.bf16.mxu0 0
    %1217 = vmatpush1.bf16.msra.mxu0 0
    %1218 = vmatprep.subr.bf16.mxu0 0
    %1219 = vmatpush1.bf16.msra.mxu0 0
    %1220 = vmatprep.subr.bf16.mxu0 0
    %1221 = vmatpush1.bf16.msra.mxu0 0
    %1222 = vmatprep.subr.bf16.mxu0 0
    %1223 = vmatpush1.bf16.msra.mxu0 0
    %1224 = vmatprep.subr.bf16.mxu0 0
    %1225 = vmatpush1.bf16.msra.mxu0 0
    %1226 = vmatprep.mubr.bf16.mxu0 0
    %1227 = vmatmul.mubr.bf16.gmra.mrb[0].mxu0 %v1001
    %v1228 = vpop.f32.mrb[0].mxu0
    %v1229 = vadd.f32 %v1144, %v1228
    %v1230 = vpop.f32.mrb[0].mxu0
    %v1231 = vpop.f32.mrb[0].mxu0
    %v1232 = vpop.f32.mrb[0].mxu0
    %1233 = vdwg.mxu0
    %v1234 = vxor.u32 %v1229, 2147483648
    %v1235 = vmul.f32 %v1234, 1.442695
    %v1236 = vpow.pop %v1235
    %v1237 = vadd.f32 %v1236, 1.0
    %v1238 = vrcp.pop %v1237
    %v1239 = vmul.f32 1.0, %v1238
    %v1240 = vtanh.pop %v1229
    %v1241 = vmul.f32 %v1239, 0.0
    %1243 = vrot.lane.b32.xlu0 %v1240, 64
    %v1244 = vpop.permute.xlu0 %1243
    %v1246 = vmul.f32 %v1239, %v1244
    %1248 = vrot.lane.b32.xlu0 %v1246, 32
    %v1249 = vpop.permute.xlu0 %1248
    %v1251 = vadd.f32 %v1241, %v1249
    %v1252 = vtanh.pop %v1251
    %1254 = vrot.lane.b32.xlu0 %v1252, 64
    %v1255 = vpop.permute.xlu0 %1254
    %v1257 = vmul.f32 %v1239, %v1255
    %v1258 = vld [vmem:[#allocation8] sm:$0xf]
    %v1259 = vld [vmem:[#allocation8 + $0x4] sm:$0xf]
    %v1260 = vld [vmem:[#allocation8 + $0x8] sm:$0xf]
    %v1261 = vld [vmem:[#allocation8 + $0xc] sm:$0xf]
    %v1266 = vunpack.c.l.b16 %v1258
    %v1267 = vunpack.c.l.b16 %v1259
    %v1268 = vunpack.c.l.b16 %v1260
    %v1269 = vunpack.c.l.b16 %v1261
    %v1270 = vpack.c.b16 %v1267, %v1266
    %v1271 = vpack.c.b16 %v1269, %v1268
    %v1274 = vsel %vm212, 0, 0
    %1276 = vmatprep.subr.bf16.mxu0 0
    %1277 = vmatpush1.bf16.msra.mxu0 %v1270
    %1278 = vmatprep.subr.bf16.mxu0 0
    %1279 = vmatpush1.bf16.msra.mxu0 %v1271
    %1280 = vmatprep.subr.bf16.mxu0 0
    %1281 = vmatpush1.bf16.msra.mxu0 0
    %1282 = vmatprep.subr.bf16.mxu0 0
    %1283 = vmatpush1.bf16.msra.mxu0 0
    %1284 = vmatprep.subr.bf16.mxu0 0
    %1285 = vmatpush1.bf16.msra.mxu0 0
    %1286 = vmatprep.subr.bf16.mxu0 0
    %1287 = vmatpush1.bf16.msra.mxu0 0
    %1288 = vmatprep.subr.bf16.mxu0 0
    %1289 = vmatpush1.bf16.msra.mxu0 0
    %1290 = vmatprep.subr.bf16.mxu0 0
    %1291 = vmatpush1.bf16.msra.mxu0 0
    %1292 = vmatprep.subr.bf16.mxu0 0
    %1293 = vmatpush1.bf16.msra.mxu0 0
    %1294 = vmatprep.subr.bf16.mxu0 0
    %1295 = vmatpush1.bf16.msra.mxu0 0
    %1296 = vmatprep.subr.bf16.mxu0 0
    %1297 = vmatpush1.bf16.msra.mxu0 0
    %1298 = vmatprep.subr.bf16.mxu0 0
    %1299 = vmatpush1.bf16.msra.mxu0 0
    %1300 = vmatprep.subr.bf16.mxu0 0
    %1301 = vmatpush1.bf16.msra.mxu0 0
    %1302 = vmatprep.subr.bf16.mxu0 0
    %1303 = vmatpush1.bf16.msra.mxu0 0
    %1304 = vmatprep.subr.bf16.mxu0 0
    %1305 = vmatpush1.bf16.msra.mxu0 0
    %1306 = vmatprep.subr.bf16.mxu0 0
    %1307 = vmatpush1.bf16.msra.mxu0 0
    %1308 = vmatprep.mubr.bf16.mxu0 0
    %1309 = vmatmul.mubr.bf16.gmra.mrb[0].mxu0 %v1274
    %v1310 = vpop.f32.mrb[0].mxu0
    %v1311 = vadd.f32 0.0, %v1310
    %v1312 = vpop.f32.mrb[0].mxu0
    %v1313 = vpop.f32.mrb[0].mxu0
    %v1314 = vpop.f32.mrb[0].mxu0
    %1315 = vdwg.mxu0
    %v1317 = vrot.slane %v1311, 4
    %v1319 = vadd.f32 %v1120, %v1317
    %v1320 = vxor.u32 %v1319, 2147483648
    %v1321 = vmul.f32 %v1320, 1.442695
    %v1322 = vpow.pop %v1321
    %v1323 = vadd.f32 %v1322, 1.0
    %v1324 = vrcp.pop %v1323
    %v1325 = vmul.f32 1.0, %v1324
    %v1326 = vtanh.pop %v1319
    %v1327 = vmul.f32 %v1325, 0.0
    %1329 = vrot.lane.b32.xlu0 %v1326, 64
    %v1330 = vpop.permute.xlu0 %1329
    %v1332 = vmul.f32 %v1325, %v1330
    %1334 = vrot.lane.b32.xlu0 %v1332, 32
    %v1335 = vpop.permute.xlu0 %1334
    %v1337 = vadd.f32 %v1327, %v1335
    %v1338 = vtanh.pop %v1337
    %1340 = vrot.lane.b32.xlu0 %v1338, 64
    %v1341 = vpop.permute.xlu0 %1340
    %v1343 = vmul.f32 %v1325, %v1341
    %v1344 = vpack.c.bf16 %v1343, %v1343
    %v1346 = vrot.slane %v1344, 2
    %1347 = vrot.lane.b32.xlu0 %v1346, 32
    %v1348 = vpop.permute.xlu0 %1347
    %v1350 = vsel %vm212, %v1348, 0
    %1352 = vmatprep.subr.bf16.mxu0 0
    %1353 = vmatpush1.bf16.msra.mxu0 %v1270
    %1354 = vmatprep.subr.bf16.mxu0 0
    %1355 = vmatpush1.bf16.msra.mxu0 %v1271
    %1356 = vmatprep.subr.bf16.mxu0 0
    %1357 = vmatpush1.bf16.msra.mxu0 0
    %1358 = vmatprep.subr.bf16.mxu0 0
    %1359 = vmatpush1.bf16.msra.mxu0 0
    %1360 = vmatprep.subr.bf16.mxu0 0
    %1361 = vmatpush1.bf16.msra.mxu0 0
    %1362 = vmatprep.subr.bf16.mxu0 0
    %1363 = vmatpush1.bf16.msra.mxu0 0
    %1364 = vmatprep.subr.bf16.mxu0 0
    %1365 = vmatpush1.bf16.msra.mxu0 0
    %1366 = vmatprep.subr.bf16.mxu0 0
    %1367 = vmatpush1.bf16.msra.mxu0 0
    %1368 = vmatprep.subr.bf16.mxu0 0
    %1369 = vmatpush1.bf16.msra.mxu0 0
    %1370 = vmatprep.subr.bf16.mxu0 0
    %1371 = vmatpush1.bf16.msra.mxu0 0
    %1372 = vmatprep.subr.bf16.mxu0 0
    %1373 = vmatpush1.bf16.msra.mxu0 0
    %1374 = vmatprep.subr.bf16.mxu0 0
    %1375 = vmatpush1.bf16.msra.mxu0 0
    %1376 = vmatprep.subr.bf16.mxu0 0
    %1377 = vmatpush1.bf16.msra.mxu0 0
    %1378 = vmatprep.subr.bf16.mxu0 0
    %1379 = vmatpush1.bf16.msra.mxu0 0
    %1380 = vmatprep.subr.bf16.mxu0 0
    %1381 = vmatpush1.bf16.msra.mxu0 0
    %1382 = vmatprep.subr.bf16.mxu0 0
    %1383 = vmatpush1.bf16.msra.mxu0 0
    %1384 = vmatprep.mubr.bf16.mxu0 0
    %1385 = vmatmul.mubr.bf16.gmra.mrb[0].mxu0 %v1350
    %v1386 = vpop.f32.mrb[0].mxu0
    %v1387 = vadd.f32 0.0, %v1386
    %v1388 = vpop.f32.mrb[0].mxu0
    %v1389 = vpop.f32.mrb[0].mxu0
    %v1390 = vpop.f32.mrb[0].mxu0
    %1391 = vdwg.mxu0
    %v1392 = vadd.f32 %v1120, %v1387
    %v1393 = vxor.u32 %v1392, 2147483648
    %v1394 = vmul.f32 %v1393, 1.442695
    %v1395 = vpow.pop %v1394
    %v1396 = vadd.f32 %v1395, 1.0
    %v1397 = vrcp.pop %v1396
    %v1398 = vmul.f32 1.0, %v1397
    %v1399 = vtanh.pop %v1392
    %v1401 = vrot.slane %v1337, 4
    %v1403 = vmul.f32 %v1398, %v1401
    %1405 = vrot.lane.b32.xlu0 %v1399, 64
    %v1406 = vpop.permute.xlu0 %1405
    %v1408 = vmul.f32 %v1398, %v1406
    %1410 = vrot.lane.b32.xlu0 %v1408, 32
    %v1411 = vpop.permute.xlu0 %1410
    %v1413 = vadd.f32 %v1403, %v1411
    %v1414 = vtanh.pop %v1413
    %1416 = vrot.lane.b32.xlu0 %v1414, 64
    %v1417 = vpop.permute.xlu0 %1416
    %v1419 = vmul.f32 %v1398, %v1417
    %v1420 = vpack.c.bf16 %v1419, %v1419
    %1422 = vrot.lane.b32.xlu0 %v1420, 32
    %v1423 = vpop.permute.xlu0 %1422
    %v1425 = vsel %vm212, %v1423, 0
    %1427 = vmatprep.subr.bf16.mxu0 0
    %1428 = vmatpush1.bf16.msra.mxu0 %v1270
    %1429 = vmatprep.subr.bf16.mxu0 0
    %1430 = vmatpush1.bf16.msra.mxu0 %v1271
    %1431 = vmatprep.subr.bf16.mxu0 0
    %1432 = vmatpush1.bf16.msra.mxu0 0
    %1433 = vmatprep.subr.bf16.mxu0 0
    %1434 = vmatpush1.bf16.msra.mxu0 0
    %1435 = vmatprep.subr.bf16.mxu0 0
    %1436 = vmatpush1.bf16.msra.mxu0 0
    %1437 = vmatprep.subr.bf16.mxu0 0
    %1438 = vmatpush1.bf16.msra.mxu0 0
    %1439 = vmatprep.subr.bf16.mxu0 0
    %1440 = vmatpush1.bf16.msra.mxu0 0
    %1441 = vmatprep.subr.bf16.mxu0 0
    %1442 = vmatpush1.bf16.msra.mxu0 0
    %1443 = vmatprep.subr.bf16.mxu0 0
    %1444 = vmatpush1.bf16.msra.mxu0 0
    %1445 = vmatprep.subr.bf16.mxu0 0
    %1446 = vmatpush1.bf16.msra.mxu0 0
    %1447 = vmatprep.subr.bf16.mxu0 0
    %1448 = vmatpush1.bf16.msra.mxu0 0
    %1449 = vmatprep.subr.bf16.mxu0 0
    %1450 = vmatpush1.bf16.msra.mxu0 0
    %1451 = vmatprep.subr.bf16.mxu0 0
    %1452 = vmatpush1.bf16.msra.mxu0 0
    %1453 = vmatprep.subr.bf16.mxu0 0
    %1454 = vmatpush1.bf16.msra.mxu0 0
    %1455 = vmatprep.subr.bf16.mxu0 0
    %1456 = vmatpush1.bf16.msra.mxu0 0
    %1457 = vmatprep.subr.bf16.mxu0 0
    %1458 = vmatpush1.bf16.msra.mxu0 0
    %1459 = vmatprep.mubr.bf16.mxu0 0
    %1460 = vmatmul.mubr.bf16.gmra.mrb[0].mxu0 %v1425
    %v1461 = vpop.f32.mrb[0].mxu0
    %v1462 = vadd.f32 0.0, %v1461
    %v1463 = vpop.f32.mrb[0].mxu0
    %v1464 = vpop.f32.mrb[0].mxu0
    %v1465 = vpop.f32.mrb[0].mxu0
    %1466 = vdwg.mxu0
    %v1468 = vrot.slane %v1462, 4
    %v1470 = vadd.f32 %v1117, %v1468
    %v1471 = vxor.u32 %v1470, 2147483648
    %v1472 = vmul.f32 %v1471, 1.442695
    %v1473 = vpow.pop %v1472
    %v1474 = vadd.f32 %v1473, 1.0
    %v1475 = vrcp.pop %v1474
    %v1476 = vmul.f32 1.0, %v1475
    %v1477 = vtanh.pop %v1470
    %v1479 = vrot.slane %v1413, 4
    %v1481 = vmul.f32 %v1476, %v1479
    %1483 = vrot.lane.b32.xlu0 %v1477, 64
    %v1484 = vpop.permute.xlu0 %1483
    %v1486 = vmul.f32 %v1476, %v1484
    %1488 = vrot.lane.b32.xlu0 %v1486, 32
    %v1489 = vpop.permute.xlu0 %1488
    %v1491 = vadd.f32 %v1481, %v1489
    %v1492 = vtanh.pop %v1491
    %1494 = vrot.lane.b32.xlu0 %v1492, 64
    %v1495 = vpop.permute.xlu0 %1494
    %v1497 = vmul.f32 %v1476, %v1495
    %v1498 = vpack.c.bf16 %v1497, %v1497
    %v1500 = vrot.slane %v1498, 2
    %1501 = vrot.lane.b32.xlu0 %v1500, 32
    %v1502 = vpop.permute.xlu0 %1501
    %v1504 = vsel %vm212, %v1502, 0
    %1506 = vmatprep.subr.bf16.mxu0 0
    %1507 = vmatpush1.bf16.msra.mxu0 %v1270
    %1508 = vmatprep.subr.bf16.mxu0 0
    %1509 = vmatpush1.bf16.msra.mxu0 %v1271
    %1510 = vmatprep.subr.bf16.mxu0 0
    %1511 = vmatpush1.bf16.msra.mxu0 0
    %1512 = vmatprep.subr.bf16.mxu0 0
    %1513 = vmatpush1.bf16.msra.mxu0 0
    %1514 = vmatprep.subr.bf16.mxu0 0
    %1515 = vmatpush1.bf16.msra.mxu0 0
    %1516 = vmatprep.subr.bf16.mxu0 0
    %1517 = vmatpush1.bf16.msra.mxu0 0
    %1518 = vmatprep.subr.bf16.mxu0 0
    %1519 = vmatpush1.bf16.msra.mxu0 0
    %1520 = vmatprep.subr.bf16.mxu0 0
    %1521 = vmatpush1.bf16.msra.mxu0 0
    %1522 = vmatprep.subr.bf16.mxu0 0
    %1523 = vmatpush1.bf16.msra.mxu0 0
    %1524 = vmatprep.subr.bf16.mxu0 0
    %1525 = vmatpush1.bf16.msra.mxu0 0
    %1526 = vmatprep.subr.bf16.mxu0 0
    %1527 = vmatpush1.bf16.msra.mxu0 0
    %1528 = vmatprep.subr.bf16.mxu0 0
    %1529 = vmatpush1.bf16.msra.mxu0 0
    %1530 = vmatprep.subr.bf16.mxu0 0
    %1531 = vmatpush1.bf16.msra.mxu0 0
    %1532 = vmatprep.subr.bf16.mxu0 0
    %1533 = vmatpush1.bf16.msra.mxu0 0
    %1534 = vmatprep.subr.bf16.mxu0 0
    %1535 = vmatpush1.bf16.msra.mxu0 0
    %1536 = vmatprep.subr.bf16.mxu0 0
    %1537 = vmatpush1.bf16.msra.mxu0 0
    %1538 = vmatprep.mubr.bf16.mxu0 0
    %1539 = vmatmul.mubr.bf16.gmra.mrb[0].mxu0 %v1504
    %v1540 = vpop.f32.mrb[0].mxu0
    %v1541 = vadd.f32 0.0, %v1540
    %v1542 = vpop.f32.mrb[0].mxu0
    %v1543 = vpop.f32.mrb[0].mxu0
    %v1544 = vpop.f32.mrb[0].mxu0
    %1545 = vdwg.mxu0
    %v1546 = vadd.f32 %v1117, %v1541
    %v1547 = vxor.u32 %v1546, 2147483648
    %v1548 = vmul.f32 %v1547, 1.442695
    %v1549 = vpow.pop %v1548
    %v1550 = vadd.f32 %v1549, 1.0
    %v1551 = vrcp.pop %v1550
    %v1552 = vmul.f32 1.0, %v1551
    %v1553 = vtanh.pop %v1546
    %v1555 = vrot.slane %v1491, 4
    %v1557 = vmul.f32 %v1552, %v1555
    %1559 = vrot.lane.b32.xlu0 %v1553, 64
    %v1560 = vpop.permute.xlu0 %1559
    %v1562 = vmul.f32 %v1552, %v1560
    %1564 = vrot.lane.b32.xlu0 %v1562, 32
    %v1565 = vpop.permute.xlu0 %1564
    %v1567 = vadd.f32 %v1557, %v1565
    %v1568 = vtanh.pop %v1567
    %1570 = vrot.lane.b32.xlu0 %v1568, 64
    %v1571 = vpop.permute.xlu0 %1570
    %v1573 = vmul.f32 %v1552, %v1571
    %v1574 = vpack.c.bf16 %v1573, %v1573
    %1576 = vrot.lane.b32.xlu0 %v1574, 32
    %v1577 = vpop.permute.xlu0 %1576
    %v1579 = vsel %vm212, %v1577, 0
    %1581 = vmatprep.subr.bf16.mxu0 0
    %1582 = vmatpush1.bf16.msra.mxu0 %v1270
    %1583 = vmatprep.subr.bf16.mxu0 0
    %1584 = vmatpush1.bf16.msra.mxu0 %v1271
    %1585 = vmatprep.subr.bf16.mxu0 0
    %1586 = vmatpush1.bf16.msra.mxu0 0
    %1587 = vmatprep.subr.bf16.mxu0 0
    %1588 = vmatpush1.bf16.msra.mxu0 0
    %1589 = vmatprep.subr.bf16.mxu0 0
    %1590 = vmatpush1.bf16.msra.mxu0 0
    %1591 = vmatprep.subr.bf16.mxu0 0
    %1592 = vmatpush1.bf16.msra.mxu0 0
    %1593 = vmatprep.subr.bf16.mxu0 0
    %1594 = vmatpush1.bf16.msra.mxu0 0
    %1595 = vmatprep.subr.bf16.mxu0 0
    %1596 = vmatpush1.bf16.msra.mxu0 0
    %1597 = vmatprep.subr.bf16.mxu0 0
    %1598 = vmatpush1.bf16.msra.mxu0 0
    %1599 = vmatprep.subr.bf16.mxu0 0
    %1600 = vmatpush1.bf16.msra.mxu0 0
    %1601 = vmatprep.subr.bf16.mxu0 0
    %1602 = vmatpush1.bf16.msra.mxu0 0
    %1603 = vmatprep.subr.bf16.mxu0 0
    %1604 = vmatpush1.bf16.msra.mxu0 0
    %1605 = vmatprep.subr.bf16.mxu0 0
    %1606 = vmatpush1.bf16.msra.mxu0 0
    %1607 = vmatprep.subr.bf16.mxu0 0
    %1608 = vmatpush1.bf16.msra.mxu0 0
    %1609 = vmatprep.subr.bf16.mxu0 0
    %1610 = vmatpush1.bf16.msra.mxu0 0
    %1611 = vmatprep.subr.bf16.mxu0 0
    %1612 = vmatpush1.bf16.msra.mxu0 0
    %1613 = vmatprep.mubr.bf16.mxu0 0
    %1614 = vmatmul.mubr.bf16.gmra.mrb[0].mxu0 %v1579
    %v1615 = vpop.f32.mrb[0].mxu0
    %v1616 = vadd.f32 0.0, %v1615
    %v1617 = vpop.f32.mrb[0].mxu0
    %v1618 = vpop.f32.mrb[0].mxu0
    %v1619 = vpop.f32.mrb[0].mxu0
    %1620 = vdwg.mxu0
    %v1622 = vrot.slane %v1616, 4
    %v1624 = vadd.f32 %v1112, %v1622
    %v1625 = vxor.u32 %v1624, 2147483648
    %v1626 = vmul.f32 %v1625, 1.442695
    %v1627 = vpow.pop %v1626
    %v1628 = vadd.f32 %v1627, 1.0
    %v1629 = vrcp.pop %v1628
    %v1630 = vmul.f32 1.0, %v1629
    %v1631 = vtanh.pop %v1624
    %v1633 = vrot.slane %v1567, 4
    %v1635 = vmul.f32 %v1630, %v1633
    %1637 = vrot.lane.b32.xlu0 %v1631, 64
    %v1638 = vpop.permute.xlu0 %1637
    %v1640 = vmul.f32 %v1630, %v1638
    %1642 = vrot.lane.b32.xlu0 %v1640, 32
    %v1643 = vpop.permute.xlu0 %1642
    %v1645 = vadd.f32 %v1635, %v1643
    %v1646 = vtanh.pop %v1645
    %1648 = vrot.lane.b32.xlu0 %v1646, 64
    %v1649 = vpop.permute.xlu0 %1648
    %v1651 = vmul.f32 %v1630, %v1649
    %v1652 = vpack.c.bf16 %v1651, %v1651
    %v1654 = vrot.slane %v1652, 2
    %1655 = vrot.lane.b32.xlu0 %v1654, 32
    %v1656 = vpop.permute.xlu0 %1655
    %v1658 = vsel %vm212, %v1656, 0
    %1660 = vmatprep.subr.bf16.mxu0 0
    %1661 = vmatpush1.bf16.msra.mxu0 %v1270
    %1662 = vmatprep.subr.bf16.mxu0 0
    %1663 = vmatpush1.bf16.msra.mxu0 %v1271
    %1664 = vmatprep.subr.bf16.mxu0 0
    %1665 = vmatpush1.bf16.msra.mxu0 0
    %1666 = vmatprep.subr.bf16.mxu0 0
    %1667 = vmatpush1.bf16.msra.mxu0 0
    %1668 = vmatprep.subr.bf16.mxu0 0
    %1669 = vmatpush1.bf16.msra.mxu0 0
    %1670 = vmatprep.subr.bf16.mxu0 0
    %1671 = vmatpush1.bf16.msra.mxu0 0
    %1672 = vmatprep.subr.bf16.mxu0 0
    %1673 = vmatpush1.bf16.msra.mxu0 0
    %1674 = vmatprep.subr.bf16.mxu0 0
    %1675 = vmatpush1.bf16.msra.mxu0 0
    %1676 = vmatprep.subr.bf16.mxu0 0
    %1677 = vmatpush1.bf16.msra.mxu0 0
    %1678 = vmatprep.subr.bf16.mxu0 0
    %1679 = vmatpush1.bf16.msra.mxu0 0
    %1680 = vmatprep.subr.bf16.mxu0 0
    %1681 = vmatpush1.bf16.msra.mxu0 0
    %1682 = vmatprep.subr.bf16.mxu0 0
    %1683 = vmatpush1.bf16.msra.mxu0 0
    %1684 = vmatprep.subr.bf16.mxu0 0
    %1685 = vmatpush1.bf16.msra.mxu0 0
    %1686 = vmatprep.subr.bf16.mxu0 0
    %1687 = vmatpush1.bf16.msra.mxu0 0
    %1688 = vmatprep.subr.bf16.mxu0 0
    %1689 = vmatpush1.bf16.msra.mxu0 0
    %1690 = vmatprep.subr.bf16.mxu0 0
    %1691 = vmatpush1.bf16.msra.mxu0 0
    %1692 = vmatprep.mubr.bf16.mxu0 0
    %1693 = vmatmul.mubr.bf16.gmra.mrb[0].mxu0 %v1658
    %v1694 = vpop.f32.mrb[0].mxu0
    %v1695 = vadd.f32 0.0, %v1694
    %v1696 = vpop.f32.mrb[0].mxu0
    %v1697 = vpop.f32.mrb[0].mxu0
    %v1698 = vpop.f32.mrb[0].mxu0
    %1699 = vdwg.mxu0
    %v1700 = vadd.f32 %v1112, %v1695
    %v1701 = vxor.u32 %v1700, 2147483648
    %v1702 = vmul.f32 %v1701, 1.442695
    %v1703 = vpow.pop %v1702
    %v1704 = vadd.f32 %v1703, 1.0
    %v1705 = vrcp.pop %v1704
    %v1706 = vmul.f32 1.0, %v1705
    %v1707 = vtanh.pop %v1700
    %v1709 = vrot.slane %v1645, 4
    %v1711 = vmul.f32 %v1706, %v1709
    %1713 = vrot.lane.b32.xlu0 %v1707, 64
    %v1714 = vpop.permute.xlu0 %1713
    %v1716 = vmul.f32 %v1706, %v1714
    %1718 = vrot.lane.b32.xlu0 %v1716, 32
    %v1719 = vpop.permute.xlu0 %1718
    %v1721 = vadd.f32 %v1711, %v1719
    %v1722 = vtanh.pop %v1721
    %1724 = vrot.lane.b32.xlu0 %v1722, 64
    %v1725 = vpop.permute.xlu0 %1724
    %v1727 = vmul.f32 %v1706, %v1725
    %v1728 = vpack.c.bf16 %v1727, %v1727
    %1730 = vrot.lane.b32.xlu0 %v1728, 32
    %v1731 = vpop.permute.xlu0 %1730
    %v1733 = vsel %vm212, %v1731, 0
    %1735 = vmatprep.subr.bf16.mxu0 0
    %1736 = vmatpush1.bf16.msra.mxu0 %v1270
    %1737 = vmatprep.subr.bf16.mxu0 0
    %1738 = vmatpush1.bf16.msra.mxu0 %v1271
    %1739 = vmatprep.subr.bf16.mxu0 0
    %1740 = vmatpush1.bf16.msra.mxu0 0
    %1741 = vmatprep.subr.bf16.mxu0 0
    %1742 = vmatpush1.bf16.msra.mxu0 0
    %1743 = vmatprep.subr.bf16.mxu0 0
    %1744 = vmatpush1.bf16.msra.mxu0 0
    %1745 = vmatprep.subr.bf16.mxu0 0
    %1746 = vmatpush1.bf16.msra.mxu0 0
    %1747 = vmatprep.subr.bf16.mxu0 0
    %1748 = vmatpush1.bf16.msra.mxu0 0
    %1749 = vmatprep.subr.bf16.mxu0 0
    %1750 = vmatpush1.bf16.msra.mxu0 0
    %1751 = vmatprep.subr.bf16.mxu0 0
    %1752 = vmatpush1.bf16.msra.mxu0 0
    %1753 = vmatprep.subr.bf16.mxu0 0
    %1754 = vmatpush1.bf16.msra.mxu0 0
    %1755 = vmatprep.subr.bf16.mxu0 0
    %1756 = vmatpush1.bf16.msra.mxu0 0
    %1757 = vmatprep.subr.bf16.mxu0 0
    %1758 = vmatpush1.bf16.msra.mxu0 0
    %1759 = vmatprep.subr.bf16.mxu0 0
    %1760 = vmatpush1.bf16.msra.mxu0 0
    %1761 = vmatprep.subr.bf16.mxu0 0
    %1762 = vmatpush1.bf16.msra.mxu0 0
    %1763 = vmatprep.subr.bf16.mxu0 0
    %1764 = vmatpush1.bf16.msra.mxu0 0
    %1765 = vmatprep.subr.bf16.mxu0 0
    %1766 = vmatpush1.bf16.msra.mxu0 0
    %1767 = vmatprep.mubr.bf16.mxu0 0
    %1768 = vmatmul.mubr.bf16.gmra.mrb[0].mxu0 %v1733
    %v1769 = vpop.f32.mrb[0].mxu0
    %v1770 = vadd.f32 0.0, %v1769
    %v1771 = vpop.f32.mrb[0].mxu0
    %v1772 = vpop.f32.mrb[0].mxu0
    %v1773 = vpop.f32.mrb[0].mxu0
    %1774 = vdwg.mxu0
    %v1776 = vrot.slane %v1770, 4
    %v1778 = vadd.f32 %v1109, %v1776
    %v1779 = vxor.u32 %v1778, 2147483648
    %v1780 = vmul.f32 %v1779, 1.442695
    %v1781 = vpow.pop %v1780
    %v1782 = vadd.f32 %v1781, 1.0
    %v1783 = vrcp.pop %v1782
    %v1784 = vmul.f32 1.0, %v1783
    %v1785 = vtanh.pop %v1778
    %v1787 = vrot.slane %v1721, 4
    %v1789 = vmul.f32 %v1784, %v1787
    %1791 = vrot.lane.b32.xlu0 %v1785, 64
    %v1792 = vpop.permute.xlu0 %1791
    %v1794 = vmul.f32 %v1784, %v1792
    %1796 = vrot.lane.b32.xlu0 %v1794, 32
    %v1797 = vpop.permute.xlu0 %1796
    %v1799 = vadd.f32 %v1789, %v1797
    %v1800 = vtanh.pop %v1799
    %1802 = vrot.lane.b32.xlu0 %v1800, 64
    %v1803 = vpop.permute.xlu0 %1802
    %v1805 = vmul.f32 %v1784, %v1803
    %v1806 = vpack.c.bf16 %v1805, %v1805
    %v1808 = vrot.slane %v1806, 2
    %1809 = vrot.lane.b32.xlu0 %v1808, 32
    %v1810 = vpop.permute.xlu0 %1809
    %v1812 = vsel %vm212, %v1810, 0
    %1814 = vmatprep.subr.bf16.mxu0 0
    %1815 = vmatpush1.bf16.msra.mxu0 %v1270
    %1816 = vmatprep.subr.bf16.mxu0 0
    %1817 = vmatpush1.bf16.msra.mxu0 %v1271
    %1818 = vmatprep.subr.bf16.mxu0 0
    %1819 = vmatpush1.bf16.msra.mxu0 0
    %1820 = vmatprep.subr.bf16.mxu0 0
    %1821 = vmatpush1.bf16.msra.mxu0 0
    %1822 = vmatprep.subr.bf16.mxu0 0
    %1823 = vmatpush1.bf16.msra.mxu0 0
    %1824 = vmatprep.subr.bf16.mxu0 0
    %1825 = vmatpush1.bf16.msra.mxu0 0
    %1826 = vmatprep.subr.bf16.mxu0 0
    %1827 = vmatpush1.bf16.msra.mxu0 0
    %1828 = vmatprep.subr.bf16.mxu0 0
    %1829 = vmatpush1.bf16.msra.mxu0 0
    %1830 = vmatprep.subr.bf16.mxu0 0
    %1831 = vmatpush1.bf16.msra.mxu0 0
    %1832 = vmatprep.subr.bf16.mxu0 0
    %1833 = vmatpush1.bf16.msra.mxu0 0
    %1834 = vmatprep.subr.bf16.mxu0 0
    %1835 = vmatpush1.bf16.msra.mxu0 0
    %1836 = vmatprep.subr.bf16.mxu0 0
    %1837 = vmatpush1.bf16.msra.mxu0 0
    %1838 = vmatprep.subr.bf16.mxu0 0
    %1839 = vmatpush1.bf16.msra.mxu0 0
    %1840 = vmatprep.subr.bf16.mxu0 0
    %1841 = vmatpush1.bf16.msra.mxu0 0
    %1842 = vmatprep.subr.bf16.mxu0 0
    %1843 = vmatpush1.bf16.msra.mxu0 0
    %1844 = vmatprep.subr.bf16.mxu0 0
    %1845 = vmatpush1.bf16.msra.mxu0 0
    %1846 = vmatprep.mubr.bf16.mxu0 0
    %1847 = vmatmul.mubr.bf16.gmra.mrb[0].mxu0 %v1812
    %v1848 = vpop.f32.mrb[0].mxu0
    %v1849 = vadd.f32 0.0, %v1848
    %v1850 = vpop.f32.mrb[0].mxu0
    %v1851 = vpop.f32.mrb[0].mxu0
    %v1852 = vpop.f32.mrb[0].mxu0
    %1853 = vdwg.mxu0
    %v1854 = vadd.f32 %v1109, %v1849
    %v1855 = vxor.u32 %v1854, 2147483648
    %v1856 = vmul.f32 %v1855, 1.442695
    %v1857 = vpow.pop %v1856
    %v1858 = vadd.f32 %v1857, 1.0
    %v1859 = vrcp.pop %v1858
    %v1860 = vmul.f32 1.0, %v1859
    %v1861 = vtanh.pop %v1854
    %v1863 = vrot.slane %v1799, 4
    %v1865 = vmul.f32 %v1860, %v1863
    %1867 = vrot.lane.b32.xlu0 %v1861, 64
    %v1868 = vpop.permute.xlu0 %1867
    %v1870 = vmul.f32 %v1860, %v1868
    %1872 = vrot.lane.b32.xlu0 %v1870, 32
    %v1873 = vpop.permute.xlu0 %1872
    %v1875 = vadd.f32 %v1865, %v1873
    %v1876 = vtanh.pop %v1875
    %1878 = vrot.lane.b32.xlu0 %v1876, 64
    %v1879 = vpop.permute.xlu0 %1878
    %v1881 = vmul.f32 %v1860, %v1879
    %v1882 = vadd.f32 %v1257, %v1881
    %v1883 = vpack.c.bf16 %v1882, %v1882
    %v1884 = vld [vmem:[%s9] sm:$0xf]
    %v1885 = vld [vmem:[%s9 + $0x4] sm:$0xf]
    %v1886 = vld [vmem:[%s9 + $0x8] sm:$0xf]
    %v1887 = vld [vmem:[%s9 + $0xc] sm:$0xf]
    %v1888 = vld [vmem:[%s10] sm:$0x1]
    %v1890 = vlaneseq
    %v1891 = vshrl.u32 %v1890, 7
    %v1892 = vsub.s32 0, %v1891
    %v1893 = vrot.slane %v1888, %v1892
    %1896 = vrot.lane.b32.xlu0 %v1883, 32
    %v1897 = vpop.permute.xlu0 %1896
    %v1902 = vunpack.c.l.b16 %v1884
    %v1903 = vunpack.c.l.b16 %v1885
    %v1904 = vunpack.c.l.b16 %v1886
    %v1905 = vunpack.c.l.b16 %v1887
    %v1906 = vpack.c.b16 %v1903, %v1902
    %v1907 = vpack.c.b16 %v1905, %v1904
    %v1911 = vsel %vm212, %v1897, 0
    %1913 = vmatprep.subr.bf16.mxu0 0
    %1914 = vmatpush1.bf16.msra.mxu0 %v1906
    %1915 = vmatprep.subr.bf16.mxu0 0
    %1916 = vmatpush1.bf16.msra.mxu0 %v1907
    %1917 = vmatprep.subr.bf16.mxu0 0
    %1918 = vmatpush1.bf16.msra.mxu0 0
    %1919 = vmatprep.subr.bf16.mxu0 0
    %1920 = vmatpush1.bf16.msra.mxu0 0
    %1921 = vmatprep.subr.bf16.mxu0 0
    %1922 = vmatpush1.bf16.msra.mxu0 0
    %1923 = vmatprep.subr.bf16.mxu0 0
    %1924 = vmatpush1.bf16.msra.mxu0 0
    %1925 = vmatprep.subr.bf16.mxu0 0
    %1926 = vmatpush1.bf16.msra.mxu0 0
    %1927 = vmatprep.subr.bf16.mxu0 0
    %1928 = vmatpush1.bf16.msra.mxu0 0
    %1929 = vmatprep.subr.bf16.mxu0 0
    %1930 = vmatpush1.bf16.msra.mxu0 0
    %1931 = vmatprep.subr.bf16.mxu0 0
    %1932 = vmatpush1.bf16.msra.mxu0 0
    %1933 = vmatprep.subr.bf16.mxu0 0
    %1934 = vmatpush1.bf16.msra.mxu0 0
    %1935 = vmatprep.subr.bf16.mxu0 0
    %1936 = vmatpush1.bf16.msra.mxu0 0
    %1937 = vmatprep.subr.bf16.mxu0 0
    %1938 = vmatpush1.bf16.msra.mxu0 0
    %1939 = vmatprep.subr.bf16.mxu0 0
    %1940 = vmatpush1.bf16.msra.mxu0 0
    %1941 = vmatprep.subr.bf16.mxu0 0
    %1942 = vmatpush1.bf16.msra.mxu0 0
    %1943 = vmatprep.subr.bf16.mxu0 0
    %1944 = vmatpush1.bf16.msra.mxu0 0
    %1945 = vmatprep.mubr.bf16.mxu0 0
    %1946 = vmatmul.mubr.bf16.gmra.mrb[0].mxu0 %v1911
    %v1947 = vpop.f32.mrb[0].mxu0
    %v1948 = vadd.f32 %v1893, %v1947
    %v1949 = vpop.f32.mrb[0].mxu0
    %v1950 = vpop.f32.mrb[0].mxu0
    %v1951 = vpop.f32.mrb[0].mxu0
    %1952 = vdwg.mxu0
    %vm1953 = vcmask 60416
    %v1954 = vsel %vm1953, %v1948, -inf
    %1955 = vmax.xlane.f32.xlu0 %v1954
    %v1956 = vpop.xlane.xlu0 %1955
    %v1957 = vsub.f32 %v1948, %v1956
    %v1958 = vmul.f32 %v1957, 1.442695
    %v1959 = vpow.pop %v1958
    %v1960 = vsel %vm1953, %v1959, 0.0
    %1961 = vadd.xlane.f32.xlu0 %v1960
    %v1962 = vpop.xlane.xlu0 %1961
    %v1963 = vrcp.pop %v1962
    %v1964 = vmul.f32 %v1959, %v1963
    %1965 = vst.msk [vmem:[#allocation11] sm:$0xf] %vm1953, %v1964
    // Predicated region
    $region66: #{_lambda_.1} parent=1 // pred_check
      _
    $region67: #{_lambda_.1} parent=1 // pred_check_branch
      %1967 = sbr.rel (0) target = $region69
    $region68: #{_lambda_.1} parent=1 // pred_region
      %s1969 = ssub.s32 64, 64
      %1970 = vsyncadd [#allocation4], %s1969
      %s1972 = sshll.u32 [#allocation11], 4
      %s1973 = int_to_ptr.vmem [resolvable:$true] %s1972
      %1975 = dma.vmem_to_hbm [thread:$0]  %s1973, 64, %s11, [#allocation4]
    $region69: #{_lambda_.1} parent=1 // pred_fallthru
      _
    // Predicated region
    $region70: #{_lambda_.1} parent=1 // pred_check
      _
    $region71: #{_lambda_.1} parent=1 // pred_check_branch
      %1977 = sbr.rel (0) target = $region73
    $region72: #{_lambda_.1} parent=1 // pred_region
      %1978 = dma.done [#allocation4], 64
    $region73: #{_lambda_.1} parent=1 // pred_fallthru
      _
    %1979 = vsyncpa [#allocation3], 1
    %1980 = vsyncpa [#allocation6], 1
    %1981 = vsyncpa [#allocation9], 1
    %1982 = vsyncpa [#allocation4], 1

</llo_original>
